<compile_context>
chip_gen: v5e
topology: v5e:2x2
jax: 0.10.0
libtpu: 0.0.40
codegen_flags: <defaults>
</compile_context>

<pallas_src>
import jax
import jax.numpy as jnp
from jax.experimental import pallas as pl
from jax.experimental.pallas import tpu as pltpu


# --------------------------------------------------------------------------
# Single fused kernel: vc = Linear(img_global) -> h0 split; bi-LSTM over S;
# output head.  PyTorch gate order (i, f, g, o); bias = b_ih + b_hh pre-summed.
# --------------------------------------------------------------------------
def _fused_kernel(wc_ref,        # (S*B, In)  f32   row = t*B + b (time-major)
                  img_ref,       # (B, 2048)  bf16  global image feature
                  vcw_ref,       # (2048, D)  bf16
                  vcb_ref,       # (1, D)     f32
                  wih_ref,       # (In, 8*Hb) f32   [fwd i,f,g,o | bwd i,f,g,o]
                  bih_ref,       # (1, 8*Hb)  f32
                  whhf_ref,      # (Hb, 4*Hb) f32
                  whhb_ref,      # (Hb, 4*Hb) f32
                  o1w_ref,       # (D, 128)   f32
                  o1b_ref,       # (1, 128)   f32
                  o2w_ref,       # (128, 128) f32   (labels zero-padded to 128 lanes)
                  o2b_ref,       # (1, 128)   f32
                  out_ref,       # (S*B, 128) f32
                  hseq_ref):     # VMEM scratch (S*B, D) f32
    B = img_ref.shape[0]
    Hb = whhf_ref.shape[0]
    S = wc_ref.shape[0] // B

    # ---- h0 from the global image feature: vc = Linear(2048 -> D) -----------
    vc = (jnp.dot(img_ref[...], vcw_ref[...],
                  preferred_element_type=jnp.float32) + vcb_ref[...])      # (B, D)
    h_f = vc[:, 0:Hb]                 # forward-direction h0  (vc_init[0])
    h_b = vc[:, Hb:2 * Hb]            # backward-direction h0 (vc_init[1])
    c_f = jnp.zeros((B, Hb), jnp.float32)
    c_b = jnp.zeros((B, Hb), jnp.float32)

    # ---- hoisted input projection: whole sequence+batch, both directions ----
    xg = (jnp.dot(wc_ref[...], wih_ref[...],
                  preferred_element_type=jnp.float32) + bih_ref[...])      # (S*B, 8Hb)

    whh_f = whhf_ref[...]
    whh_b = whhb_ref[...]

    def cell(xg_t, h, c, whh):
        g = xg_t + jnp.dot(h, whh, preferred_element_type=jnp.float32)     # (B, 4Hb)
        i = jax.nn.sigmoid(g[:, 0:Hb])
        f = jax.nn.sigmoid(g[:, Hb:2 * Hb])
        gg = jnp.tanh(g[:, 2 * Hb:3 * Hb])
        o = jax.nn.sigmoid(g[:, 3 * Hb:4 * Hb])
        c_new = f * c + i * gg
        h_new = o * jnp.tanh(c_new)
        return h_new, c_new

    # ---- fused fwd/bwd recurrence, fully unrolled (S is small & static) -----
    for s in range(S):
        tf = s
        tb = S - 1 - s
        xg_f = xg[tf * B:(tf + 1) * B, 0:4 * Hb]
        xg_b = xg[tb * B:(tb + 1) * B, 4 * Hb:8 * Hb]
        h_f, c_f = cell(xg_f, h_f, c_f, whh_f)
        h_b, c_b = cell(xg_b, h_b, c_b, whh_b)
        hseq_ref[tf * B:(tf + 1) * B, 0:Hb] = h_f
        hseq_ref[tb * B:(tb + 1) * B, Hb:2 * Hb] = h_b

    # ---- output head: Linear(D,128) -> ReLU -> Dropout(eval id) -> Linear ---
    wm = hseq_ref[...]                                                     # (S*B, D)
    o1 = jnp.maximum(
        jnp.dot(wm, o1w_ref[...], preferred_element_type=jnp.float32)
        + o1b_ref[...], 0.0)                                               # (S*B, 128)
    out_ref[...] = (jnp.dot(o1, o2w_ref[...],
                            preferred_element_type=jnp.float32)
                    + o2b_ref[...])                                        # (S*B, 128)


# --------------------------------------------------------------------------
# Parameters (deterministic, synthetic) and forward pass.
# --------------------------------------------------------------------------
def init_params(key, *, vocab, word_dim, D, labels):
    keys = iter(jax.random.split(key, 16))

    def mat(shape, scale=0.1):
        return (scale * jax.random.normal(next(keys), shape)).astype(jnp.float32)

    Hb = D // 2
    In = word_dim + D                  # LSTM input = word emb + char emb (char dim == D)
    return {
        "word_table": mat((vocab, word_dim)),
        # vc = nn.Linear(2048, before_att_size)
        "vc_w": mat((2048, D)), "vc_b": mat((1, D)),
        # bi-LSTM, PyTorch gate order (i,f,g,o); single bias == b_ih + b_hh pre-summed
        "f_wih": mat((In, 4 * Hb)), "f_whh": mat((Hb, 4 * Hb)), "f_b": mat((1, 4 * Hb)),
        "b_wih": mat((In, 4 * Hb)), "b_whh": mat((Hb, 4 * Hb)), "b_b": mat((1, 4 * Hb)),
        # output head
        "o1_w": mat((D, 128)), "o1_b": mat((1, 128)),
        "o2_w": mat((128, labels)), "o2_b": mat((1, labels)),
    }


def forward(params, word_id, char_feats, img_global):
    """word_id: (B,S) int32; char_feats: (B,S,D) f32; img_global: (B,2048) f32."""
    B, S = word_id.shape
    D = params["vc_w"].shape[1]
    In = params["f_wih"].shape[0]
    L = params["o2_w"].shape[1]
    LP = 128                                   # lane-padded label width

    # Embedding lookup + concat with external char features (XLA glue).
    word_emb = params["word_table"][word_id]                        # (B, S, word_dim)
    wc = jnp.concatenate([word_emb, char_feats], axis=-1)           # (B, S, In)
    # Time-major flatten: row t*B + b -> contiguous per-timestep slices in-kernel.
    wc_tm = wc.transpose(1, 0, 2).reshape(S * B, In)

    # Pack both directions' input projections column-wise: [fwd 4Hb | bwd 4Hb].
    wih_cat = jnp.concatenate([params["f_wih"], params["b_wih"]], axis=1)   # (In, 8Hb)
    bih_cat = jnp.concatenate([params["f_b"], params["b_b"]], axis=1)       # (1, 8Hb)

    # Pad output head to a lane-dense 128-wide store; slice back after the call.
    o2_w = jnp.pad(params["o2_w"], ((0, 0), (0, LP - L)))
    o2_b = jnp.pad(params["o2_b"], ((0, 0), (0, LP - L)))

    out_flat = pl.pallas_call(
        _fused_kernel,
        out_shape=jax.ShapeDtypeStruct((S * B, LP), jnp.float32),
        in_specs=[pl.BlockSpec(memory_space=pltpu.MemorySpace.VMEM)] * 12,
        out_specs=pl.BlockSpec(memory_space=pltpu.MemorySpace.VMEM),
        scratch_shapes=[pltpu.VMEM((S * B, D), jnp.float32)],
    )(wc_tm,
      img_global.astype(jnp.bfloat16),          # bf16 MXU operands for the
      params["vc_w"].astype(jnp.bfloat16),      # 2048-channel vc projection
      params["vc_b"],
      wih_cat, bih_cat,
      params["f_whh"], params["b_whh"],
      params["o1_w"], params["o1_b"],
      o2_w, o2_b)

    # (S*B, 128) -> (B, S, labels)
    return out_flat.reshape(S, B, LP).transpose(1, 0, 2)[:, :, :L]


if __name__ == "__main__":
    B, S = 2, 8
    WORD_DIM = 32      # args.word_emb_dim
    D = 32             # args.before_att_size  (bi-LSTM hidden = D // 2 per direction)
    VOCAB = 50
    LABELS = 11

    key = jax.random.PRNGKey(0)
    k_p, k_w, k_c, k_i = jax.random.split(key, 4)
    params = init_params(k_p, vocab=VOCAB, word_dim=WORD_DIM, D=D, labels=LABELS)

    word_id = jax.random.randint(k_w, (B, S), 0, VOCAB, dtype=jnp.int32)
    # TODO(synk): char_embed / image_embed are external submodules in the reference;
    # their outputs (char_feats, img_global) are synthesized inputs here.
    char_feats = (0.1 * jax.random.normal(k_c, (B, S, D))).astype(jnp.float32)
    img_global = (0.1 * jax.random.normal(k_i, (B, 2048))).astype(jnp.float32)

    out = jax.jit(forward)(params, word_id, char_feats, img_global)
    out = jax.block_until_ready(out)
    assert out.shape == (B, S, LABELS)
    print("KERNEL_OK")
</pallas_src>

<mosaic_0001>
module attributes {stable_mosaic.version = 11 : i64} {
  func.func @_fused_kernel(%arg0: memref<16x64xf32, #tpu.memory_space<vmem>>, %arg1: memref<2x2048xbf16, #tpu.memory_space<vmem>>, %arg2: memref<2048x32xbf16, #tpu.memory_space<vmem>>, %arg3: memref<1x32xf32, #tpu.memory_space<vmem>>, %arg4: memref<64x128xf32, #tpu.memory_space<vmem>>, %arg5: memref<1x128xf32, #tpu.memory_space<vmem>>, %arg6: memref<16x64xf32, #tpu.memory_space<vmem>>, %arg7: memref<16x64xf32, #tpu.memory_space<vmem>>, %arg8: memref<32x128xf32, #tpu.memory_space<vmem>>, %arg9: memref<1x128xf32, #tpu.memory_space<vmem>>, %arg10: memref<128x128xf32, #tpu.memory_space<vmem>>, %arg11: memref<1x128xf32, #tpu.memory_space<vmem>>, %arg12: memref<16x128xf32, #tpu.memory_space<vmem>>, %arg13: memref<16x32xf32, #tpu.memory_space<vmem>>) attributes {dimension_semantics = [], scalar_prefetch = 0 : i64, scratch_operands = 1 : i64, tpu.core_type = #tpu.core_type<tc>} {
    %c0 = arith.constant 0 : index
    %c0_0 = arith.constant 0 : index
    %0 = vector.load %arg1[%c0, %c0_0] : memref<2x2048xbf16, #tpu.memory_space<vmem>>, vector<2x2048xbf16>
    %c0_1 = arith.constant 0 : index
    %c0_2 = arith.constant 0 : index
    %1 = vector.load %arg2[%c0_1, %c0_2] : memref<2048x32xbf16, #tpu.memory_space<vmem>>, vector<2048x32xbf16>
    %cst = arith.constant dense<0.000000e+00> : vector<2x32xf32>
    %2 = tpu.matmul %0, %1, %cst {dimension_numbers = #tpu.dot_dimension_numbers<[1], [0], [0], [1], [0, 0, 1, 1], [], []>} : vector<2x2048xbf16>, vector<2048x32xbf16>, vector<2x32xf32> -> vector<2x32xf32>
    %c0_3 = arith.constant 0 : index
    %c0_4 = arith.constant 0 : index
    %3 = vector.load %arg3[%c0_3, %c0_4] : memref<1x32xf32, #tpu.memory_space<vmem>>, vector<1x32xf32>
    %4 = vector.broadcast %3 : vector<1x32xf32> to vector<2x32xf32>
    %5 = arith.addf %2, %4 : vector<2x32xf32>
    %6 = vector.extract_strided_slice %5 {offsets = [0, 0], sizes = [2, 16], strides = [1, 1]} : vector<2x32xf32> to vector<2x16xf32>
    %7 = vector.extract_strided_slice %5 {offsets = [0, 16], sizes = [2, 16], strides = [1, 1]} : vector<2x32xf32> to vector<2x16xf32>
    %cst_5 = arith.constant 0.000000e+00 : f32
    %8 = vector.broadcast %cst_5 : f32 to vector<2x16xf32>
    %cst_6 = arith.constant 0.000000e+00 : f32
    %9 = vector.broadcast %cst_6 : f32 to vector<2x16xf32>
    %c0_7 = arith.constant 0 : index
    %c0_8 = arith.constant 0 : index
    %10 = vector.load %arg0[%c0_7, %c0_8] : memref<16x64xf32, #tpu.memory_space<vmem>>, vector<16x64xf32>
    %c0_9 = arith.constant 0 : index
    %c0_10 = arith.constant 0 : index
    %11 = vector.load %arg4[%c0_9, %c0_10] : memref<64x128xf32, #tpu.memory_space<vmem>>, vector<64x128xf32>
    %cst_11 = arith.constant dense<0.000000e+00> : vector<16x128xf32>
    %12 = tpu.matmul %10, %11, %cst_11 {dimension_numbers = #tpu.dot_dimension_numbers<[1], [0], [0], [1], [0, 0, 1, 1], [], []>} : vector<16x64xf32>, vector<64x128xf32>, vector<16x128xf32> -> vector<16x128xf32>
    %c0_12 = arith.constant 0 : index
    %c0_13 = arith.constant 0 : index
    %13 = vector.load %arg5[%c0_12, %c0_13] : memref<1x128xf32, #tpu.memory_space<vmem>>, vector<1x128xf32>
    %14 = vector.broadcast %13 : vector<1x128xf32> to vector<16x128xf32>
    %15 = arith.addf %12, %14 : vector<16x128xf32>
    %c0_14 = arith.constant 0 : index
    %c0_15 = arith.constant 0 : index
    %16 = vector.load %arg6[%c0_14, %c0_15] : memref<16x64xf32, #tpu.memory_space<vmem>>, vector<16x64xf32>
    %c0_16 = arith.constant 0 : index
    %c0_17 = arith.constant 0 : index
    %17 = vector.load %arg7[%c0_16, %c0_17] : memref<16x64xf32, #tpu.memory_space<vmem>>, vector<16x64xf32>
    %18 = vector.extract_strided_slice %15 {offsets = [0, 0], sizes = [2, 64], strides = [1, 1]} : vector<16x128xf32> to vector<2x64xf32>
    %19 = vector.extract_strided_slice %15 {offsets = [14, 64], sizes = [2, 64], strides = [1, 1]} : vector<16x128xf32> to vector<2x64xf32>
    %cst_18 = arith.constant dense<0.000000e+00> : vector<2x64xf32>
    %20 = tpu.matmul %6, %16, %cst_18 {dimension_numbers = #tpu.dot_dimension_numbers<[1], [0], [0], [1], [0, 0, 1, 1], [], []>} : vector<2x16xf32>, vector<16x64xf32>, vector<2x64xf32> -> vector<2x64xf32>
    %21 = arith.addf %18, %20 : vector<2x64xf32>
    %22 = vector.extract_strided_slice %21 {offsets = [0, 0], sizes = [2, 16], strides = [1, 1]} : vector<2x64xf32> to vector<2x16xf32>
    %23 = arith.negf %22 : vector<2x16xf32>
    %24 = math.exp %23 : vector<2x16xf32>
    %cst_19 = arith.constant 1.000000e+00 : f32
    %25 = vector.broadcast %cst_19 : f32 to vector<2x16xf32>
    %26 = arith.addf %25, %24 : vector<2x16xf32>
    %27 = arith.divf %25, %26 : vector<2x16xf32>
    %28 = vector.extract_strided_slice %21 {offsets = [0, 16], sizes = [2, 16], strides = [1, 1]} : vector<2x64xf32> to vector<2x16xf32>
    %29 = arith.negf %28 : vector<2x16xf32>
    %30 = math.exp %29 : vector<2x16xf32>
    %cst_20 = arith.constant 1.000000e+00 : f32
    %31 = vector.broadcast %cst_20 : f32 to vector<2x16xf32>
    %32 = arith.addf %31, %30 : vector<2x16xf32>
    %33 = arith.divf %31, %32 : vector<2x16xf32>
    %34 = vector.extract_strided_slice %21 {offsets = [0, 32], sizes = [2, 16], strides = [1, 1]} : vector<2x64xf32> to vector<2x16xf32>
    %35 = math.tanh %34 : vector<2x16xf32>
    %36 = vector.extract_strided_slice %21 {offsets = [0, 48], sizes = [2, 16], strides = [1, 1]} : vector<2x64xf32> to vector<2x16xf32>
    %37 = arith.negf %36 : vector<2x16xf32>
    %38 = math.exp %37 : vector<2x16xf32>
    %cst_21 = arith.constant 1.000000e+00 : f32
    %39 = vector.broadcast %cst_21 : f32 to vector<2x16xf32>
    %40 = arith.addf %39, %38 : vector<2x16xf32>
    %41 = arith.divf %39, %40 : vector<2x16xf32>
    %42 = arith.mulf %33, %8 : vector<2x16xf32>
    %43 = arith.mulf %27, %35 : vector<2x16xf32>
    %44 = arith.addf %42, %43 : vector<2x16xf32>
    %45 = math.tanh %44 : vector<2x16xf32>
    %46 = arith.mulf %41, %45 : vector<2x16xf32>
    %cst_22 = arith.constant dense<0.000000e+00> : vector<2x64xf32>
    %47 = tpu.matmul %7, %17, %cst_22 {dimension_numbers = #tpu.dot_dimension_numbers<[1], [0], [0], [1], [0, 0, 1, 1], [], []>} : vector<2x16xf32>, vector<16x64xf32>, vector<2x64xf32> -> vector<2x64xf32>
    %48 = arith.addf %19, %47 : vector<2x64xf32>
    %49 = vector.extract_strided_slice %48 {offsets = [0, 0], sizes = [2, 16], strides = [1, 1]} : vector<2x64xf32> to vector<2x16xf32>
    %50 = arith.negf %49 : vector<2x16xf32>
    %51 = math.exp %50 : vector<2x16xf32>
    %cst_23 = arith.constant 1.000000e+00 : f32
    %52 = vector.broadcast %cst_23 : f32 to vector<2x16xf32>
    %53 = arith.addf %52, %51 : vector<2x16xf32>
    %54 = arith.divf %52, %53 : vector<2x16xf32>
    %55 = vector.extract_strided_slice %48 {offsets = [0, 16], sizes = [2, 16], strides = [1, 1]} : vector<2x64xf32> to vector<2x16xf32>
    %56 = arith.negf %55 : vector<2x16xf32>
    %57 = math.exp %56 : vector<2x16xf32>
    %cst_24 = arith.constant 1.000000e+00 : f32
    %58 = vector.broadcast %cst_24 : f32 to vector<2x16xf32>
    %59 = arith.addf %58, %57 : vector<2x16xf32>
    %60 = arith.divf %58, %59 : vector<2x16xf32>
    %61 = vector.extract_strided_slice %48 {offsets = [0, 32], sizes = [2, 16], strides = [1, 1]} : vector<2x64xf32> to vector<2x16xf32>
    %62 = math.tanh %61 : vector<2x16xf32>
    %63 = vector.extract_strided_slice %48 {offsets = [0, 48], sizes = [2, 16], strides = [1, 1]} : vector<2x64xf32> to vector<2x16xf32>
    %64 = arith.negf %63 : vector<2x16xf32>
    %65 = math.exp %64 : vector<2x16xf32>
    %cst_25 = arith.constant 1.000000e+00 : f32
    %66 = vector.broadcast %cst_25 : f32 to vector<2x16xf32>
    %67 = arith.addf %66, %65 : vector<2x16xf32>
    %68 = arith.divf %66, %67 : vector<2x16xf32>
    %69 = arith.mulf %60, %9 : vector<2x16xf32>
    %70 = arith.mulf %54, %62 : vector<2x16xf32>
    %71 = arith.addf %69, %70 : vector<2x16xf32>
    %72 = math.tanh %71 : vector<2x16xf32>
    %73 = arith.mulf %68, %72 : vector<2x16xf32>
    %c0_26 = arith.constant 0 : index
    %c0_27 = arith.constant 0 : index
    %74 = vector.load %arg13[%c0_26, %c0_27] : memref<16x32xf32, #tpu.memory_space<vmem>>, vector<2x16xf32>
    tpu.vector_store %arg13[%c0_26, %c0_27], %46 {strides = array<i32>} : memref<16x32xf32, #tpu.memory_space<vmem>>, vector<2x16xf32>,
    %c14 = arith.constant 14 : index
    %c16 = arith.constant 16 : index
    %75 = vector.load %arg13[%c14, %c16] : memref<16x32xf32, #tpu.memory_space<vmem>>, vector<2x16xf32>
    tpu.vector_store %arg13[%c14, %c16], %73 {strides = array<i32>} : memref<16x32xf32, #tpu.memory_space<vmem>>, vector<2x16xf32>,
    %76 = vector.extract_strided_slice %15 {offsets = [2, 0], sizes = [2, 64], strides = [1, 1]} : vector<16x128xf32> to vector<2x64xf32>
    %77 = vector.extract_strided_slice %15 {offsets = [12, 64], sizes = [2, 64], strides = [1, 1]} : vector<16x128xf32> to vector<2x64xf32>
    %cst_28 = arith.constant dense<0.000000e+00> : vector<2x64xf32>
    %78 = tpu.matmul %46, %16, %cst_28 {dimension_numbers = #tpu.dot_dimension_numbers<[1], [0], [0], [1], [0, 0, 1, 1], [], []>} : vector<2x16xf32>, vector<16x64xf32>, vector<2x64xf32> -> vector<2x64xf32>
    %79 = arith.addf %76, %78 : vector<2x64xf32>
    %80 = vector.extract_strided_slice %79 {offsets = [0, 0], sizes = [2, 16], strides = [1, 1]} : vector<2x64xf32> to vector<2x16xf32>
    %81 = arith.negf %80 : vector<2x16xf32>
    %82 = math.exp %81 : vector<2x16xf32>
    %cst_29 = arith.constant 1.000000e+00 : f32
    %83 = vector.broadcast %cst_29 : f32 to vector<2x16xf32>
    %84 = arith.addf %83, %82 : vector<2x16xf32>
    %85 = arith.divf %83, %84 : vector<2x16xf32>
    %86 = vector.extract_strided_slice %79 {offsets = [0, 16], sizes = [2, 16], strides = [1, 1]} : vector<2x64xf32> to vector<2x16xf32>
    %87 = arith.negf %86 : vector<2x16xf32>
    %88 = math.exp %87 : vector<2x16xf32>
    %cst_30 = arith.constant 1.000000e+00 : f32
    %89 = vector.broadcast %cst_30 : f32 to vector<2x16xf32>
    %90 = arith.addf %89, %88 : vector<2x16xf32>
    %91 = arith.divf %89, %90 : vector<2x16xf32>
    %92 = vector.extract_strided_slice %79 {offsets = [0, 32], sizes = [2, 16], strides = [1, 1]} : vector<2x64xf32> to vector<2x16xf32>
    %93 = math.tanh %92 : vector<2x16xf32>
    %94 = vector.extract_strided_slice %79 {offsets = [0, 48], sizes = [2, 16], strides = [1, 1]} : vector<2x64xf32> to vector<2x16xf32>
    %95 = arith.negf %94 : vector<2x16xf32>
    %96 = math.exp %95 : vector<2x16xf32>
    %cst_31 = arith.constant 1.000000e+00 : f32
    %97 = vector.broadcast %cst_31 : f32 to vector<2x16xf32>
    %98 = arith.addf %97, %96 : vector<2x16xf32>
    %99 = arith.divf %97, %98 : vector<2x16xf32>
    %100 = arith.mulf %91, %44 : vector<2x16xf32>
    %101 = arith.mulf %85, %93 : vector<2x16xf32>
    %102 = arith.addf %100, %101 : vector<2x16xf32>
    %103 = math.tanh %102 : vector<2x16xf32>
    %104 = arith.mulf %99, %103 : vector<2x16xf32>
    %cst_32 = arith.constant dense<0.000000e+00> : vector<2x64xf32>
    %105 = tpu.matmul %73, %17, %cst_32 {dimension_numbers = #tpu.dot_dimension_numbers<[1], [0], [0], [1], [0, 0, 1, 1], [], []>} : vector<2x16xf32>, vector<16x64xf32>, vector<2x64xf32> -> vector<2x64xf32>
    %106 = arith.addf %77, %105 : vector<2x64xf32>
    %107 = vector.extract_strided_slice %106 {offsets = [0, 0], sizes = [2, 16], strides = [1, 1]} : vector<2x64xf32> to vector<2x16xf32>
    %108 = arith.negf %107 : vector<2x16xf32>
    %109 = math.exp %108 : vector<2x16xf32>
    %cst_33 = arith.constant 1.000000e+00 : f32
    %110 = vector.broadcast %cst_33 : f32 to vector<2x16xf32>
    %111 = arith.addf %110, %109 : vector<2x16xf32>
    %112 = arith.divf %110, %111 : vector<2x16xf32>
    %113 = vector.extract_strided_slice %106 {offsets = [0, 16], sizes = [2, 16], strides = [1, 1]} : vector<2x64xf32> to vector<2x16xf32>
    %114 = arith.negf %113 : vector<2x16xf32>
    %115 = math.exp %114 : vector<2x16xf32>
    %cst_34 = arith.constant 1.000000e+00 : f32
    %116 = vector.broadcast %cst_34 : f32 to vector<2x16xf32>
    %117 = arith.addf %116, %115 : vector<2x16xf32>
    %118 = arith.divf %116, %117 : vector<2x16xf32>
    %119 = vector.extract_strided_slice %106 {offsets = [0, 32], sizes = [2, 16], strides = [1, 1]} : vector<2x64xf32> to vector<2x16xf32>
    %120 = math.tanh %119 : vector<2x16xf32>
    %121 = vector.extract_strided_slice %106 {offsets = [0, 48], sizes = [2, 16], strides = [1, 1]} : vector<2x64xf32> to vector<2x16xf32>
    %122 = arith.negf %121 : vector<2x16xf32>
    %123 = math.exp %122 : vector<2x16xf32>
    %cst_35 = arith.constant 1.000000e+00 : f32
    %124 = vector.broadcast %cst_35 : f32 to vector<2x16xf32>
    %125 = arith.addf %124, %123 : vector<2x16xf32>
    %126 = arith.divf %124, %125 : vector<2x16xf32>
    %127 = arith.mulf %118, %71 : vector<2x16xf32>
    %128 = arith.mulf %112, %120 : vector<2x16xf32>
    %129 = arith.addf %127, %128 : vector<2x16xf32>
    %130 = math.tanh %129 : vector<2x16xf32>
    %131 = arith.mulf %126, %130 : vector<2x16xf32>
    %c2 = arith.constant 2 : index
    %c0_36 = arith.constant 0 : index
    %132 = vector.load %arg13[%c2, %c0_36] : memref<16x32xf32, #tpu.memory_space<vmem>>, vector<2x16xf32>
    tpu.vector_store %arg13[%c2, %c0_36], %104 {strides = array<i32>} : memref<16x32xf32, #tpu.memory_space<vmem>>, vector<2x16xf32>,
    %c12 = arith.constant 12 : index
    %c16_37 = arith.constant 16 : index
    %133 = vector.load %arg13[%c12, %c16_37] : memref<16x32xf32, #tpu.memory_space<vmem>>, vector<2x16xf32>
    tpu.vector_store %arg13[%c12, %c16_37], %131 {strides = array<i32>} : memref<16x32xf32, #tpu.memory_space<vmem>>, vector<2x16xf32>,
    %134 = vector.extract_strided_slice %15 {offsets = [4, 0], sizes = [2, 64], strides = [1, 1]} : vector<16x128xf32> to vector<2x64xf32>
    %135 = vector.extract_strided_slice %15 {offsets = [10, 64], sizes = [2, 64], strides = [1, 1]} : vector<16x128xf32> to vector<2x64xf32>
    %cst_38 = arith.constant dense<0.000000e+00> : vector<2x64xf32>
    %136 = tpu.matmul %104, %16, %cst_38 {dimension_numbers = #tpu.dot_dimension_numbers<[1], [0], [0], [1], [0, 0, 1, 1], [], []>} : vector<2x16xf32>, vector<16x64xf32>, vector<2x64xf32> -> vector<2x64xf32>
    %137 = arith.addf %134, %136 : vector<2x64xf32>
    %138 = vector.extract_strided_slice %137 {offsets = [0, 0], sizes = [2, 16], strides = [1, 1]} : vector<2x64xf32> to vector<2x16xf32>
    %139 = arith.negf %138 : vector<2x16xf32>
    %140 = math.exp %139 : vector<2x16xf32>
    %cst_39 = arith.constant 1.000000e+00 : f32
    %141 = vector.broadcast %cst_39 : f32 to vector<2x16xf32>
    %142 = arith.addf %141, %140 : vector<2x16xf32>
    %143 = arith.divf %141, %142 : vector<2x16xf32>
    %144 = vector.extract_strided_slice %137 {offsets = [0, 16], sizes = [2, 16], strides = [1, 1]} : vector<2x64xf32> to vector<2x16xf32>
    %145 = arith.negf %144 : vector<2x16xf32>
    %146 = math.exp %145 : vector<2x16xf32>
    %cst_40 = arith.constant 1.000000e+00 : f32
    %147 = vector.broadcast %cst_40 : f32 to vector<2x16xf32>
    %148 = arith.addf %147, %146 : vector<2x16xf32>
    %149 = arith.divf %147, %148 : vector<2x16xf32>
    %150 = vector.extract_strided_slice %137 {offsets = [0, 32], sizes = [2, 16], strides = [1, 1]} : vector<2x64xf32> to vector<2x16xf32>
    %151 = math.tanh %150 : vector<2x16xf32>
    %152 = vector.extract_strided_slice %137 {offsets = [0, 48], sizes = [2, 16], strides = [1, 1]} : vector<2x64xf32> to vector<2x16xf32>
    %153 = arith.negf %152 : vector<2x16xf32>
    %154 = math.exp %153 : vector<2x16xf32>
    %cst_41 = arith.constant 1.000000e+00 : f32
    %155 = vector.broadcast %cst_41 : f32 to vector<2x16xf32>
    %156 = arith.addf %155, %154 : vector<2x16xf32>
    %157 = arith.divf %155, %156 : vector<2x16xf32>
    %158 = arith.mulf %149, %102 : vector<2x16xf32>
    %159 = arith.mulf %143, %151 : vector<2x16xf32>
    %160 = arith.addf %158, %159 : vector<2x16xf32>
    %161 = math.tanh %160 : vector<2x16xf32>
    %162 = arith.mulf %157, %161 : vector<2x16xf32>
    %cst_42 = arith.constant dense<0.000000e+00> : vector<2x64xf32>
    %163 = tpu.matmul %131, %17, %cst_42 {dimension_numbers = #tpu.dot_dimension_numbers<[1], [0], [0], [1], [0, 0, 1, 1], [], []>} : vector<2x16xf32>, vector<16x64xf32>, vector<2x64xf32> -> vector<2x64xf32>
    %164 = arith.addf %135, %163 : vector<2x64xf32>
    %165 = vector.extract_strided_slice %164 {offsets = [0, 0], sizes = [2, 16], strides = [1, 1]} : vector<2x64xf32> to vector<2x16xf32>
    %166 = arith.negf %165 : vector<2x16xf32>
    %167 = math.exp %166 : vector<2x16xf32>
    %cst_43 = arith.constant 1.000000e+00 : f32
    %168 = vector.broadcast %cst_43 : f32 to vector<2x16xf32>
    %169 = arith.addf %168, %167 : vector<2x16xf32>
    %170 = arith.divf %168, %169 : vector<2x16xf32>
    %171 = vector.extract_strided_slice %164 {offsets = [0, 16], sizes = [2, 16], strides = [1, 1]} : vector<2x64xf32> to vector<2x16xf32>
    %172 = arith.negf %171 : vector<2x16xf32>
    %173 = math.exp %172 : vector<2x16xf32>
    %cst_44 = arith.constant 1.000000e+00 : f32
    %174 = vector.broadcast %cst_44 : f32 to vector<2x16xf32>
    %175 = arith.addf %174, %173 : vector<2x16xf32>
    %176 = arith.divf %174, %175 : vector<2x16xf32>
    %177 = vector.extract_strided_slice %164 {offsets = [0, 32], sizes = [2, 16], strides = [1, 1]} : vector<2x64xf32> to vector<2x16xf32>
    %178 = math.tanh %177 : vector<2x16xf32>
    %179 = vector.extract_strided_slice %164 {offsets = [0, 48], sizes = [2, 16], strides = [1, 1]} : vector<2x64xf32> to vector<2x16xf32>
    %180 = arith.negf %179 : vector<2x16xf32>
    %181 = math.exp %180 : vector<2x16xf32>
    %cst_45 = arith.constant 1.000000e+00 : f32
    %182 = vector.broadcast %cst_45 : f32 to vector<2x16xf32>
    %183 = arith.addf %182, %181 : vector<2x16xf32>
    %184 = arith.divf %182, %183 : vector<2x16xf32>
    %185 = arith.mulf %176, %129 : vector<2x16xf32>
    %186 = arith.mulf %170, %178 : vector<2x16xf32>
    %187 = arith.addf %185, %186 : vector<2x16xf32>
    %188 = math.tanh %187 : vector<2x16xf32>
    %189 = arith.mulf %184, %188 : vector<2x16xf32>
    %c4 = arith.constant 4 : index
    %c0_46 = arith.constant 0 : index
    %190 = vector.load %arg13[%c4, %c0_46] : memref<16x32xf32, #tpu.memory_space<vmem>>, vector<2x16xf32>
    tpu.vector_store %arg13[%c4, %c0_46], %162 {strides = array<i32>} : memref<16x32xf32, #tpu.memory_space<vmem>>, vector<2x16xf32>,
    %c10 = arith.constant 10 : index
    %c16_47 = arith.constant 16 : index
    %191 = vector.load %arg13[%c10, %c16_47] : memref<16x32xf32, #tpu.memory_space<vmem>>, vector<2x16xf32>
    tpu.vector_store %arg13[%c10, %c16_47], %189 {strides = array<i32>} : memref<16x32xf32, #tpu.memory_space<vmem>>, vector<2x16xf32>,
    %192 = vector.extract_strided_slice %15 {offsets = [6, 0], sizes = [2, 64], strides = [1, 1]} : vector<16x128xf32> to vector<2x64xf32>
    %193 = vector.extract_strided_slice %15 {offsets = [8, 64], sizes = [2, 64], strides = [1, 1]} : vector<16x128xf32> to vector<2x64xf32>
    %cst_48 = arith.constant dense<0.000000e+00> : vector<2x64xf32>
    %194 = tpu.matmul %162, %16, %cst_48 {dimension_numbers = #tpu.dot_dimension_numbers<[1], [0], [0], [1], [0, 0, 1, 1], [], []>} : vector<2x16xf32>, vector<16x64xf32>, vector<2x64xf32> -> vector<2x64xf32>
    %195 = arith.addf %192, %194 : vector<2x64xf32>
    %196 = vector.extract_strided_slice %195 {offsets = [0, 0], sizes = [2, 16], strides = [1, 1]} : vector<2x64xf32> to vector<2x16xf32>
    %197 = arith.negf %196 : vector<2x16xf32>
    %198 = math.exp %197 : vector<2x16xf32>
    %cst_49 = arith.constant 1.000000e+00 : f32
    %199 = vector.broadcast %cst_49 : f32 to vector<2x16xf32>
    %200 = arith.addf %199, %198 : vector<2x16xf32>
    %201 = arith.divf %199, %200 : vector<2x16xf32>
    %202 = vector.extract_strided_slice %195 {offsets = [0, 16], sizes = [2, 16], strides = [1, 1]} : vector<2x64xf32> to vector<2x16xf32>
    %203 = arith.negf %202 : vector<2x16xf32>
    %204 = math.exp %203 : vector<2x16xf32>
    %cst_50 = arith.constant 1.000000e+00 : f32
    %205 = vector.broadcast %cst_50 : f32 to vector<2x16xf32>
    %206 = arith.addf %205, %204 : vector<2x16xf32>
    %207 = arith.divf %205, %206 : vector<2x16xf32>
    %208 = vector.extract_strided_slice %195 {offsets = [0, 32], sizes = [2, 16], strides = [1, 1]} : vector<2x64xf32> to vector<2x16xf32>
    %209 = math.tanh %208 : vector<2x16xf32>
    %210 = vector.extract_strided_slice %195 {offsets = [0, 48], sizes = [2, 16], strides = [1, 1]} : vector<2x64xf32> to vector<2x16xf32>
    %211 = arith.negf %210 : vector<2x16xf32>
    %212 = math.exp %211 : vector<2x16xf32>
    %cst_51 = arith.constant 1.000000e+00 : f32
    %213 = vector.broadcast %cst_51 : f32 to vector<2x16xf32>
    %214 = arith.addf %213, %212 : vector<2x16xf32>
    %215 = arith.divf %213, %214 : vector<2x16xf32>
    %216 = arith.mulf %207, %160 : vector<2x16xf32>
    %217 = arith.mulf %201, %209 : vector<2x16xf32>
    %218 = arith.addf %216, %217 : vector<2x16xf32>
    %219 = math.tanh %218 : vector<2x16xf32>
    %220 = arith.mulf %215, %219 : vector<2x16xf32>
    %cst_52 = arith.constant dense<0.000000e+00> : vector<2x64xf32>
    %221 = tpu.matmul %189, %17, %cst_52 {dimension_numbers = #tpu.dot_dimension_numbers<[1], [0], [0], [1], [0, 0, 1, 1], [], []>} : vector<2x16xf32>, vector<16x64xf32>, vector<2x64xf32> -> vector<2x64xf32>
    %222 = arith.addf %193, %221 : vector<2x64xf32>
    %223 = vector.extract_strided_slice %222 {offsets = [0, 0], sizes = [2, 16], strides = [1, 1]} : vector<2x64xf32> to vector<2x16xf32>
    %224 = arith.negf %223 : vector<2x16xf32>
    %225 = math.exp %224 : vector<2x16xf32>
    %cst_53 = arith.constant 1.000000e+00 : f32
    %226 = vector.broadcast %cst_53 : f32 to vector<2x16xf32>
    %227 = arith.addf %226, %225 : vector<2x16xf32>
    %228 = arith.divf %226, %227 : vector<2x16xf32>
    %229 = vector.extract_strided_slice %222 {offsets = [0, 16], sizes = [2, 16], strides = [1, 1]} : vector<2x64xf32> to vector<2x16xf32>
    %230 = arith.negf %229 : vector<2x16xf32>
    %231 = math.exp %230 : vector<2x16xf32>
    %cst_54 = arith.constant 1.000000e+00 : f32
    %232 = vector.broadcast %cst_54 : f32 to vector<2x16xf32>
    %233 = arith.addf %232, %231 : vector<2x16xf32>
    %234 = arith.divf %232, %233 : vector<2x16xf32>
    %235 = vector.extract_strided_slice %222 {offsets = [0, 32], sizes = [2, 16], strides = [1, 1]} : vector<2x64xf32> to vector<2x16xf32>
    %236 = math.tanh %235 : vector<2x16xf32>
    %237 = vector.extract_strided_slice %222 {offsets = [0, 48], sizes = [2, 16], strides = [1, 1]} : vector<2x64xf32> to vector<2x16xf32>
    %238 = arith.negf %237 : vector<2x16xf32>
    %239 = math.exp %238 : vector<2x16xf32>
    %cst_55 = arith.constant 1.000000e+00 : f32
    %240 = vector.broadcast %cst_55 : f32 to vector<2x16xf32>
    %241 = arith.addf %240, %239 : vector<2x16xf32>
    %242 = arith.divf %240, %241 : vector<2x16xf32>
    %243 = arith.mulf %234, %187 : vector<2x16xf32>
    %244 = arith.mulf %228, %236 : vector<2x16xf32>
    %245 = arith.addf %243, %244 : vector<2x16xf32>
    %246 = math.tanh %245 : vector<2x16xf32>
    %247 = arith.mulf %242, %246 : vector<2x16xf32>
    %c6 = arith.constant 6 : index
    %c0_56 = arith.constant 0 : index
    %248 = vector.load %arg13[%c6, %c0_56] : memref<16x32xf32, #tpu.memory_space<vmem>>, vector<2x16xf32>
    tpu.vector_store %arg13[%c6, %c0_56], %220 {strides = array<i32>} : memref<16x32xf32, #tpu.memory_space<vmem>>, vector<2x16xf32>,
    %c8 = arith.constant 8 : index
    %c16_57 = arith.constant 16 : index
    %249 = vector.load %arg13[%c8, %c16_57] : memref<16x32xf32, #tpu.memory_space<vmem>>, vector<2x16xf32>
    tpu.vector_store %arg13[%c8, %c16_57], %247 {strides = array<i32>} : memref<16x32xf32, #tpu.memory_space<vmem>>, vector<2x16xf32>,
    %250 = vector.extract_strided_slice %15 {offsets = [8, 0], sizes = [2, 64], strides = [1, 1]} : vector<16x128xf32> to vector<2x64xf32>
    %251 = vector.extract_strided_slice %15 {offsets = [6, 64], sizes = [2, 64], strides = [1, 1]} : vector<16x128xf32> to vector<2x64xf32>
    %cst_58 = arith.constant dense<0.000000e+00> : vector<2x64xf32>
    %252 = tpu.matmul %220, %16, %cst_58 {dimension_numbers = #tpu.dot_dimension_numbers<[1], [0], [0], [1], [0, 0, 1, 1], [], []>} : vector<2x16xf32>, vector<16x64xf32>, vector<2x64xf32> -> vector<2x64xf32>
    %253 = arith.addf %250, %252 : vector<2x64xf32>
    %254 = vector.extract_strided_slice %253 {offsets = [0, 0], sizes = [2, 16], strides = [1, 1]} : vector<2x64xf32> to vector<2x16xf32>
    %255 = arith.negf %254 : vector<2x16xf32>
    %256 = math.exp %255 : vector<2x16xf32>
    %cst_59 = arith.constant 1.000000e+00 : f32
    %257 = vector.broadcast %cst_59 : f32 to vector<2x16xf32>
    %258 = arith.addf %257, %256 : vector<2x16xf32>
    %259 = arith.divf %257, %258 : vector<2x16xf32>
    %260 = vector.extract_strided_slice %253 {offsets = [0, 16], sizes = [2, 16], strides = [1, 1]} : vector<2x64xf32> to vector<2x16xf32>
    %261 = arith.negf %260 : vector<2x16xf32>
    %262 = math.exp %261 : vector<2x16xf32>
    %cst_60 = arith.constant 1.000000e+00 : f32
    %263 = vector.broadcast %cst_60 : f32 to vector<2x16xf32>
    %264 = arith.addf %263, %262 : vector<2x16xf32>
    %265 = arith.divf %263, %264 : vector<2x16xf32>
    %266 = vector.extract_strided_slice %253 {offsets = [0, 32], sizes = [2, 16], strides = [1, 1]} : vector<2x64xf32> to vector<2x16xf32>
    %267 = math.tanh %266 : vector<2x16xf32>
    %268 = vector.extract_strided_slice %253 {offsets = [0, 48], sizes = [2, 16], strides = [1, 1]} : vector<2x64xf32> to vector<2x16xf32>
    %269 = arith.negf %268 : vector<2x16xf32>
    %270 = math.exp %269 : vector<2x16xf32>
    %cst_61 = arith.constant 1.000000e+00 : f32
    %271 = vector.broadcast %cst_61 : f32 to vector<2x16xf32>
    %272 = arith.addf %271, %270 : vector<2x16xf32>
    %273 = arith.divf %271, %272 : vector<2x16xf32>
    %274 = arith.mulf %265, %218 : vector<2x16xf32>
    %275 = arith.mulf %259, %267 : vector<2x16xf32>
    %276 = arith.addf %274, %275 : vector<2x16xf32>
    %277 = math.tanh %276 : vector<2x16xf32>
    %278 = arith.mulf %273, %277 : vector<2x16xf32>
    %cst_62 = arith.constant dense<0.000000e+00> : vector<2x64xf32>
    %279 = tpu.matmul %247, %17, %cst_62 {dimension_numbers = #tpu.dot_dimension_numbers<[1], [0], [0], [1], [0, 0, 1, 1], [], []>} : vector<2x16xf32>, vector<16x64xf32>, vector<2x64xf32> -> vector<2x64xf32>
    %280 = arith.addf %251, %279 : vector<2x64xf32>
    %281 = vector.extract_strided_slice %280 {offsets = [0, 0], sizes = [2, 16], strides = [1, 1]} : vector<2x64xf32> to vector<2x16xf32>
    %282 = arith.negf %281 : vector<2x16xf32>
    %283 = math.exp %282 : vector<2x16xf32>
    %cst_63 = arith.constant 1.000000e+00 : f32
    %284 = vector.broadcast %cst_63 : f32 to vector<2x16xf32>
    %285 = arith.addf %284, %283 : vector<2x16xf32>
    %286 = arith.divf %284, %285 : vector<2x16xf32>
    %287 = vector.extract_strided_slice %280 {offsets = [0, 16], sizes = [2, 16], strides = [1, 1]} : vector<2x64xf32> to vector<2x16xf32>
    %288 = arith.negf %287 : vector<2x16xf32>
    %289 = math.exp %288 : vector<2x16xf32>
    %cst_64 = arith.constant 1.000000e+00 : f32
    %290 = vector.broadcast %cst_64 : f32 to vector<2x16xf32>
    %291 = arith.addf %290, %289 : vector<2x16xf32>
    %292 = arith.divf %290, %291 : vector<2x16xf32>
    %293 = vector.extract_strided_slice %280 {offsets = [0, 32], sizes = [2, 16], strides = [1, 1]} : vector<2x64xf32> to vector<2x16xf32>
    %294 = math.tanh %293 : vector<2x16xf32>
    %295 = vector.extract_strided_slice %280 {offsets = [0, 48], sizes = [2, 16], strides = [1, 1]} : vector<2x64xf32> to vector<2x16xf32>
    %296 = arith.negf %295 : vector<2x16xf32>
    %297 = math.exp %296 : vector<2x16xf32>
    %cst_65 = arith.constant 1.000000e+00 : f32
    %298 = vector.broadcast %cst_65 : f32 to vector<2x16xf32>
    %299 = arith.addf %298, %297 : vector<2x16xf32>
    %300 = arith.divf %298, %299 : vector<2x16xf32>
    %301 = arith.mulf %292, %245 : vector<2x16xf32>
    %302 = arith.mulf %286, %294 : vector<2x16xf32>
    %303 = arith.addf %301, %302 : vector<2x16xf32>
    %304 = math.tanh %303 : vector<2x16xf32>
    %305 = arith.mulf %300, %304 : vector<2x16xf32>
    %c8_66 = arith.constant 8 : index
    %c0_67 = arith.constant 0 : index
    %306 = vector.load %arg13[%c8_66, %c0_67] : memref<16x32xf32, #tpu.memory_space<vmem>>, vector<2x16xf32>
    tpu.vector_store %arg13[%c8_66, %c0_67], %278 {strides = array<i32>} : memref<16x32xf32, #tpu.memory_space<vmem>>, vector<2x16xf32>,
    %c6_68 = arith.constant 6 : index
    %c16_69 = arith.constant 16 : index
    %307 = vector.load %arg13[%c6_68, %c16_69] : memref<16x32xf32, #tpu.memory_space<vmem>>, vector<2x16xf32>
    tpu.vector_store %arg13[%c6_68, %c16_69], %305 {strides = array<i32>} : memref<16x32xf32, #tpu.memory_space<vmem>>, vector<2x16xf32>,
    %308 = vector.extract_strided_slice %15 {offsets = [10, 0], sizes = [2, 64], strides = [1, 1]} : vector<16x128xf32> to vector<2x64xf32>
    %309 = vector.extract_strided_slice %15 {offsets = [4, 64], sizes = [2, 64], strides = [1, 1]} : vector<16x128xf32> to vector<2x64xf32>
    %cst_70 = arith.constant dense<0.000000e+00> : vector<2x64xf32>
    %310 = tpu.matmul %278, %16, %cst_70 {dimension_numbers = #tpu.dot_dimension_numbers<[1], [0], [0], [1], [0, 0, 1, 1], [], []>} : vector<2x16xf32>, vector<16x64xf32>, vector<2x64xf32> -> vector<2x64xf32>
    %311 = arith.addf %308, %310 : vector<2x64xf32>
    %312 = vector.extract_strided_slice %311 {offsets = [0, 0], sizes = [2, 16], strides = [1, 1]} : vector<2x64xf32> to vector<2x16xf32>
    %313 = arith.negf %312 : vector<2x16xf32>
    %314 = math.exp %313 : vector<2x16xf32>
    %cst_71 = arith.constant 1.000000e+00 : f32
    %315 = vector.broadcast %cst_71 : f32 to vector<2x16xf32>
    %316 = arith.addf %315, %314 : vector<2x16xf32>
    %317 = arith.divf %315, %316 : vector<2x16xf32>
    %318 = vector.extract_strided_slice %311 {offsets = [0, 16], sizes = [2, 16], strides = [1, 1]} : vector<2x64xf32> to vector<2x16xf32>
    %319 = arith.negf %318 : vector<2x16xf32>
    %320 = math.exp %319 : vector<2x16xf32>
    %cst_72 = arith.constant 1.000000e+00 : f32
    %321 = vector.broadcast %cst_72 : f32 to vector<2x16xf32>
    %322 = arith.addf %321, %320 : vector<2x16xf32>
    %323 = arith.divf %321, %322 : vector<2x16xf32>
    %324 = vector.extract_strided_slice %311 {offsets = [0, 32], sizes = [2, 16], strides = [1, 1]} : vector<2x64xf32> to vector<2x16xf32>
    %325 = math.tanh %324 : vector<2x16xf32>
    %326 = vector.extract_strided_slice %311 {offsets = [0, 48], sizes = [2, 16], strides = [1, 1]} : vector<2x64xf32> to vector<2x16xf32>
    %327 = arith.negf %326 : vector<2x16xf32>
    %328 = math.exp %327 : vector<2x16xf32>
    %cst_73 = arith.constant 1.000000e+00 : f32
    %329 = vector.broadcast %cst_73 : f32 to vector<2x16xf32>
    %330 = arith.addf %329, %328 : vector<2x16xf32>
    %331 = arith.divf %329, %330 : vector<2x16xf32>
    %332 = arith.mulf %323, %276 : vector<2x16xf32>
    %333 = arith.mulf %317, %325 : vector<2x16xf32>
    %334 = arith.addf %332, %333 : vector<2x16xf32>
    %335 = math.tanh %334 : vector<2x16xf32>
    %336 = arith.mulf %331, %335 : vector<2x16xf32>
    %cst_74 = arith.constant dense<0.000000e+00> : vector<2x64xf32>
    %337 = tpu.matmul %305, %17, %cst_74 {dimension_numbers = #tpu.dot_dimension_numbers<[1], [0], [0], [1], [0, 0, 1, 1], [], []>} : vector<2x16xf32>, vector<16x64xf32>, vector<2x64xf32> -> vector<2x64xf32>
    %338 = arith.addf %309, %337 : vector<2x64xf32>
    %339 = vector.extract_strided_slice %338 {offsets = [0, 0], sizes = [2, 16], strides = [1, 1]} : vector<2x64xf32> to vector<2x16xf32>
    %340 = arith.negf %339 : vector<2x16xf32>
    %341 = math.exp %340 : vector<2x16xf32>
    %cst_75 = arith.constant 1.000000e+00 : f32
    %342 = vector.broadcast %cst_75 : f32 to vector<2x16xf32>
    %343 = arith.addf %342, %341 : vector<2x16xf32>
    %344 = arith.divf %342, %343 : vector<2x16xf32>
    %345 = vector.extract_strided_slice %338 {offsets = [0, 16], sizes = [2, 16], strides = [1, 1]} : vector<2x64xf32> to vector<2x16xf32>
    %346 = arith.negf %345 : vector<2x16xf32>
    %347 = math.exp %346 : vector<2x16xf32>
    %cst_76 = arith.constant 1.000000e+00 : f32
    %348 = vector.broadcast %cst_76 : f32 to vector<2x16xf32>
    %349 = arith.addf %348, %347 : vector<2x16xf32>
    %350 = arith.divf %348, %349 : vector<2x16xf32>
    %351 = vector.extract_strided_slice %338 {offsets = [0, 32], sizes = [2, 16], strides = [1, 1]} : vector<2x64xf32> to vector<2x16xf32>
    %352 = math.tanh %351 : vector<2x16xf32>
    %353 = vector.extract_strided_slice %338 {offsets = [0, 48], sizes = [2, 16], strides = [1, 1]} : vector<2x64xf32> to vector<2x16xf32>
    %354 = arith.negf %353 : vector<2x16xf32>
    %355 = math.exp %354 : vector<2x16xf32>
    %cst_77 = arith.constant 1.000000e+00 : f32
    %356 = vector.broadcast %cst_77 : f32 to vector<2x16xf32>
    %357 = arith.addf %356, %355 : vector<2x16xf32>
    %358 = arith.divf %356, %357 : vector<2x16xf32>
    %359 = arith.mulf %350, %303 : vector<2x16xf32>
    %360 = arith.mulf %344, %352 : vector<2x16xf32>
    %361 = arith.addf %359, %360 : vector<2x16xf32>
    %362 = math.tanh %361 : vector<2x16xf32>
    %363 = arith.mulf %358, %362 : vector<2x16xf32>
    %c10_78 = arith.constant 10 : index
    %c0_79 = arith.constant 0 : index
    %364 = vector.load %arg13[%c10_78, %c0_79] : memref<16x32xf32, #tpu.memory_space<vmem>>, vector<2x16xf32>
    tpu.vector_store %arg13[%c10_78, %c0_79], %336 {strides = array<i32>} : memref<16x32xf32, #tpu.memory_space<vmem>>, vector<2x16xf32>,
    %c4_80 = arith.constant 4 : index
    %c16_81 = arith.constant 16 : index
    %365 = vector.load %arg13[%c4_80, %c16_81] : memref<16x32xf32, #tpu.memory_space<vmem>>, vector<2x16xf32>
    tpu.vector_store %arg13[%c4_80, %c16_81], %363 {strides = array<i32>} : memref<16x32xf32, #tpu.memory_space<vmem>>, vector<2x16xf32>,
    %366 = vector.extract_strided_slice %15 {offsets = [12, 0], sizes = [2, 64], strides = [1, 1]} : vector<16x128xf32> to vector<2x64xf32>
    %367 = vector.extract_strided_slice %15 {offsets = [2, 64], sizes = [2, 64], strides = [1, 1]} : vector<16x128xf32> to vector<2x64xf32>
    %cst_82 = arith.constant dense<0.000000e+00> : vector<2x64xf32>
    %368 = tpu.matmul %336, %16, %cst_82 {dimension_numbers = #tpu.dot_dimension_numbers<[1], [0], [0], [1], [0, 0, 1, 1], [], []>} : vector<2x16xf32>, vector<16x64xf32>, vector<2x64xf32> -> vector<2x64xf32>
    %369 = arith.addf %366, %368 : vector<2x64xf32>
    %370 = vector.extract_strided_slice %369 {offsets = [0, 0], sizes = [2, 16], strides = [1, 1]} : vector<2x64xf32> to vector<2x16xf32>
    %371 = arith.negf %370 : vector<2x16xf32>
    %372 = math.exp %371 : vector<2x16xf32>
    %cst_83 = arith.constant 1.000000e+00 : f32
    %373 = vector.broadcast %cst_83 : f32 to vector<2x16xf32>
    %374 = arith.addf %373, %372 : vector<2x16xf32>
    %375 = arith.divf %373, %374 : vector<2x16xf32>
    %376 = vector.extract_strided_slice %369 {offsets = [0, 16], sizes = [2, 16], strides = [1, 1]} : vector<2x64xf32> to vector<2x16xf32>
    %377 = arith.negf %376 : vector<2x16xf32>
    %378 = math.exp %377 : vector<2x16xf32>
    %cst_84 = arith.constant 1.000000e+00 : f32
    %379 = vector.broadcast %cst_84 : f32 to vector<2x16xf32>
    %380 = arith.addf %379, %378 : vector<2x16xf32>
    %381 = arith.divf %379, %380 : vector<2x16xf32>
    %382 = vector.extract_strided_slice %369 {offsets = [0, 32], sizes = [2, 16], strides = [1, 1]} : vector<2x64xf32> to vector<2x16xf32>
    %383 = math.tanh %382 : vector<2x16xf32>
    %384 = vector.extract_strided_slice %369 {offsets = [0, 48], sizes = [2, 16], strides = [1, 1]} : vector<2x64xf32> to vector<2x16xf32>
    %385 = arith.negf %384 : vector<2x16xf32>
    %386 = math.exp %385 : vector<2x16xf32>
    %cst_85 = arith.constant 1.000000e+00 : f32
    %387 = vector.broadcast %cst_85 : f32 to vector<2x16xf32>
    %388 = arith.addf %387, %386 : vector<2x16xf32>
    %389 = arith.divf %387, %388 : vector<2x16xf32>
    %390 = arith.mulf %381, %334 : vector<2x16xf32>
    %391 = arith.mulf %375, %383 : vector<2x16xf32>
    %392 = arith.addf %390, %391 : vector<2x16xf32>
    %393 = math.tanh %392 : vector<2x16xf32>
    %394 = arith.mulf %389, %393 : vector<2x16xf32>
    %cst_86 = arith.constant dense<0.000000e+00> : vector<2x64xf32>
    %395 = tpu.matmul %363, %17, %cst_86 {dimension_numbers = #tpu.dot_dimension_numbers<[1], [0], [0], [1], [0, 0, 1, 1], [], []>} : vector<2x16xf32>, vector<16x64xf32>, vector<2x64xf32> -> vector<2x64xf32>
    %396 = arith.addf %367, %395 : vector<2x64xf32>
    %397 = vector.extract_strided_slice %396 {offsets = [0, 0], sizes = [2, 16], strides = [1, 1]} : vector<2x64xf32> to vector<2x16xf32>
    %398 = arith.negf %397 : vector<2x16xf32>
    %399 = math.exp %398 : vector<2x16xf32>
    %cst_87 = arith.constant 1.000000e+00 : f32
    %400 = vector.broadcast %cst_87 : f32 to vector<2x16xf32>
    %401 = arith.addf %400, %399 : vector<2x16xf32>
    %402 = arith.divf %400, %401 : vector<2x16xf32>
    %403 = vector.extract_strided_slice %396 {offsets = [0, 16], sizes = [2, 16], strides = [1, 1]} : vector<2x64xf32> to vector<2x16xf32>
    %404 = arith.negf %403 : vector<2x16xf32>
    %405 = math.exp %404 : vector<2x16xf32>
    %cst_88 = arith.constant 1.000000e+00 : f32
    %406 = vector.broadcast %cst_88 : f32 to vector<2x16xf32>
    %407 = arith.addf %406, %405 : vector<2x16xf32>
    %408 = arith.divf %406, %407 : vector<2x16xf32>
    %409 = vector.extract_strided_slice %396 {offsets = [0, 32], sizes = [2, 16], strides = [1, 1]} : vector<2x64xf32> to vector<2x16xf32>
    %410 = math.tanh %409 : vector<2x16xf32>
    %411 = vector.extract_strided_slice %396 {offsets = [0, 48], sizes = [2, 16], strides = [1, 1]} : vector<2x64xf32> to vector<2x16xf32>
    %412 = arith.negf %411 : vector<2x16xf32>
    %413 = math.exp %412 : vector<2x16xf32>
    %cst_89 = arith.constant 1.000000e+00 : f32
    %414 = vector.broadcast %cst_89 : f32 to vector<2x16xf32>
    %415 = arith.addf %414, %413 : vector<2x16xf32>
    %416 = arith.divf %414, %415 : vector<2x16xf32>
    %417 = arith.mulf %408, %361 : vector<2x16xf32>
    %418 = arith.mulf %402, %410 : vector<2x16xf32>
    %419 = arith.addf %417, %418 : vector<2x16xf32>
    %420 = math.tanh %419 : vector<2x16xf32>
    %421 = arith.mulf %416, %420 : vector<2x16xf32>
    %c12_90 = arith.constant 12 : index
    %c0_91 = arith.constant 0 : index
    %422 = vector.load %arg13[%c12_90, %c0_91] : memref<16x32xf32, #tpu.memory_space<vmem>>, vector<2x16xf32>
    tpu.vector_store %arg13[%c12_90, %c0_91], %394 {strides = array<i32>} : memref<16x32xf32, #tpu.memory_space<vmem>>, vector<2x16xf32>,
    %c2_92 = arith.constant 2 : index
    %c16_93 = arith.constant 16 : index
    %423 = vector.load %arg13[%c2_92, %c16_93] : memref<16x32xf32, #tpu.memory_space<vmem>>, vector<2x16xf32>
    tpu.vector_store %arg13[%c2_92, %c16_93], %421 {strides = array<i32>} : memref<16x32xf32, #tpu.memory_space<vmem>>, vector<2x16xf32>,
    %424 = vector.extract_strided_slice %15 {offsets = [14, 0], sizes = [2, 64], strides = [1, 1]} : vector<16x128xf32> to vector<2x64xf32>
    %425 = vector.extract_strided_slice %15 {offsets = [0, 64], sizes = [2, 64], strides = [1, 1]} : vector<16x128xf32> to vector<2x64xf32>
    %cst_94 = arith.constant dense<0.000000e+00> : vector<2x64xf32>
    %426 = tpu.matmul %394, %16, %cst_94 {dimension_numbers = #tpu.dot_dimension_numbers<[1], [0], [0], [1], [0, 0, 1, 1], [], []>} : vector<2x16xf32>, vector<16x64xf32>, vector<2x64xf32> -> vector<2x64xf32>
    %427 = arith.addf %424, %426 : vector<2x64xf32>
    %428 = vector.extract_strided_slice %427 {offsets = [0, 0], sizes = [2, 16], strides = [1, 1]} : vector<2x64xf32> to vector<2x16xf32>
    %429 = arith.negf %428 : vector<2x16xf32>
    %430 = math.exp %429 : vector<2x16xf32>
    %cst_95 = arith.constant 1.000000e+00 : f32
    %431 = vector.broadcast %cst_95 : f32 to vector<2x16xf32>
    %432 = arith.addf %431, %430 : vector<2x16xf32>
    %433 = arith.divf %431, %432 : vector<2x16xf32>
    %434 = vector.extract_strided_slice %427 {offsets = [0, 16], sizes = [2, 16], strides = [1, 1]} : vector<2x64xf32> to vector<2x16xf32>
    %435 = arith.negf %434 : vector<2x16xf32>
    %436 = math.exp %435 : vector<2x16xf32>
    %cst_96 = arith.constant 1.000000e+00 : f32
    %437 = vector.broadcast %cst_96 : f32 to vector<2x16xf32>
    %438 = arith.addf %437, %436 : vector<2x16xf32>
    %439 = arith.divf %437, %438 : vector<2x16xf32>
    %440 = vector.extract_strided_slice %427 {offsets = [0, 32], sizes = [2, 16], strides = [1, 1]} : vector<2x64xf32> to vector<2x16xf32>
    %441 = math.tanh %440 : vector<2x16xf32>
    %442 = vector.extract_strided_slice %427 {offsets = [0, 48], sizes = [2, 16], strides = [1, 1]} : vector<2x64xf32> to vector<2x16xf32>
    %443 = arith.negf %442 : vector<2x16xf32>
    %444 = math.exp %443 : vector<2x16xf32>
    %cst_97 = arith.constant 1.000000e+00 : f32
    %445 = vector.broadcast %cst_97 : f32 to vector<2x16xf32>
    %446 = arith.addf %445, %444 : vector<2x16xf32>
    %447 = arith.divf %445, %446 : vector<2x16xf32>
    %448 = arith.mulf %439, %392 : vector<2x16xf32>
    %449 = arith.mulf %433, %441 : vector<2x16xf32>
    %450 = arith.addf %448, %449 : vector<2x16xf32>
    %451 = math.tanh %450 : vector<2x16xf32>
    %452 = arith.mulf %447, %451 : vector<2x16xf32>
    %cst_98 = arith.constant dense<0.000000e+00> : vector<2x64xf32>
    %453 = tpu.matmul %421, %17, %cst_98 {dimension_numbers = #tpu.dot_dimension_numbers<[1], [0], [0], [1], [0, 0, 1, 1], [], []>} : vector<2x16xf32>, vector<16x64xf32>, vector<2x64xf32> -> vector<2x64xf32>
    %454 = arith.addf %425, %453 : vector<2x64xf32>
    %455 = vector.extract_strided_slice %454 {offsets = [0, 0], sizes = [2, 16], strides = [1, 1]} : vector<2x64xf32> to vector<2x16xf32>
    %456 = arith.negf %455 : vector<2x16xf32>
    %457 = math.exp %456 : vector<2x16xf32>
    %cst_99 = arith.constant 1.000000e+00 : f32
    %458 = vector.broadcast %cst_99 : f32 to vector<2x16xf32>
    %459 = arith.addf %458, %457 : vector<2x16xf32>
    %460 = arith.divf %458, %459 : vector<2x16xf32>
    %461 = vector.extract_strided_slice %454 {offsets = [0, 16], sizes = [2, 16], strides = [1, 1]} : vector<2x64xf32> to vector<2x16xf32>
    %462 = arith.negf %461 : vector<2x16xf32>
    %463 = math.exp %462 : vector<2x16xf32>
    %cst_100 = arith.constant 1.000000e+00 : f32
    %464 = vector.broadcast %cst_100 : f32 to vector<2x16xf32>
    %465 = arith.addf %464, %463 : vector<2x16xf32>
    %466 = arith.divf %464, %465 : vector<2x16xf32>
    %467 = vector.extract_strided_slice %454 {offsets = [0, 32], sizes = [2, 16], strides = [1, 1]} : vector<2x64xf32> to vector<2x16xf32>
    %468 = math.tanh %467 : vector<2x16xf32>
    %469 = vector.extract_strided_slice %454 {offsets = [0, 48], sizes = [2, 16], strides = [1, 1]} : vector<2x64xf32> to vector<2x16xf32>
    %470 = arith.negf %469 : vector<2x16xf32>
    %471 = math.exp %470 : vector<2x16xf32>
    %cst_101 = arith.constant 1.000000e+00 : f32
    %472 = vector.broadcast %cst_101 : f32 to vector<2x16xf32>
    %473 = arith.addf %472, %471 : vector<2x16xf32>
    %474 = arith.divf %472, %473 : vector<2x16xf32>
    %475 = arith.mulf %466, %419 : vector<2x16xf32>
    %476 = arith.mulf %460, %468 : vector<2x16xf32>
    %477 = arith.addf %475, %476 : vector<2x16xf32>
    %478 = math.tanh %477 : vector<2x16xf32>
    %479 = arith.mulf %474, %478 : vector<2x16xf32>
    %c14_102 = arith.constant 14 : index
    %c0_103 = arith.constant 0 : index
    %480 = vector.load %arg13[%c14_102, %c0_103] : memref<16x32xf32, #tpu.memory_space<vmem>>, vector<2x16xf32>
    tpu.vector_store %arg13[%c14_102, %c0_103], %452 {strides = array<i32>} : memref<16x32xf32, #tpu.memory_space<vmem>>, vector<2x16xf32>,
    %c0_104 = arith.constant 0 : index
    %c16_105 = arith.constant 16 : index
    %481 = vector.load %arg13[%c0_104, %c16_105] : memref<16x32xf32, #tpu.memory_space<vmem>>, vector<2x16xf32>
    tpu.vector_store %arg13[%c0_104, %c16_105], %479 {strides = array<i32>} : memref<16x32xf32, #tpu.memory_space<vmem>>, vector<2x16xf32>,
    %c0_106 = arith.constant 0 : index
    %c0_107 = arith.constant 0 : index
    %482 = vector.load %arg13[%c0_106, %c0_107] : memref<16x32xf32, #tpu.memory_space<vmem>>, vector<16x32xf32>
    %c0_108 = arith.constant 0 : index
    %c0_109 = arith.constant 0 : index
    %483 = vector.load %arg8[%c0_108, %c0_109] : memref<32x128xf32, #tpu.memory_space<vmem>>, vector<32x128xf32>
    %cst_110 = arith.constant dense<0.000000e+00> : vector<16x128xf32>
    %484 = tpu.matmul %482, %483, %cst_110 {dimension_numbers = #tpu.dot_dimension_numbers<[1], [0], [0], [1], [0, 0, 1, 1], [], []>} : vector<16x32xf32>, vector<32x128xf32>, vector<16x128xf32> -> vector<16x128xf32>
    %c0_111 = arith.constant 0 : index
    %c0_112 = arith.constant 0 : index
    %485 = vector.load %arg9[%c0_111, %c0_112] : memref<1x128xf32, #tpu.memory_space<vmem>>, vector<1x128xf32>
    %486 = vector.broadcast %485 : vector<1x128xf32> to vector<16x128xf32>
    %487 = arith.addf %484, %486 : vector<16x128xf32>
    %cst_113 = arith.constant 0.000000e+00 : f32
    %488 = vector.broadcast %cst_113 : f32 to vector<16x128xf32>
    %489 = arith.maximumf %487, %488 : vector<16x128xf32>
    %c0_114 = arith.constant 0 : index
    %c0_115 = arith.constant 0 : index
    %490 = vector.load %arg10[%c0_114, %c0_115] : memref<128x128xf32, #tpu.memory_space<vmem>>, vector<128x128xf32>
    %cst_116 = arith.constant dense<0.000000e+00> : vector<16x128xf32>
    %491 = tpu.matmul %489, %490, %cst_116 {dimension_numbers = #tpu.dot_dimension_numbers<[1], [0], [0], [1], [0, 0, 1, 1], [], []>} : vector<16x128xf32>, vector<128x128xf32>, vector<16x128xf32> -> vector<16x128xf32>
    %c0_117 = arith.constant 0 : index
    %c0_118 = arith.constant 0 : index
    %492 = vector.load %arg11[%c0_117, %c0_118] : memref<1x128xf32, #tpu.memory_space<vmem>>, vector<1x128xf32>
    %493 = vector.broadcast %492 : vector<1x128xf32> to vector<16x128xf32>
    %494 = arith.addf %491, %493 : vector<16x128xf32>
    %c0_119 = arith.constant 0 : index
    %c0_120 = arith.constant 0 : index
    %495 = vector.load %arg12[%c0_119, %c0_120] : memref<16x128xf32, #tpu.memory_space<vmem>>, vector<16x128xf32>
    tpu.vector_store %arg12[%c0_119, %c0_120], %494 {strides = array<i32>} : memref<16x128xf32, #tpu.memory_space<vmem>>, vector<16x128xf32>,
    return
  }
}

</mosaic_0001>

<llo_original>
// kernel: forward.1
$region0: #{forward.1}
  #allocation0 [shape = 'u32[]', space=smem, size = 0x4, offset = 0x4, fixed_abs, tag = 'smem constant byte address 0x4 - core index']
  #allocation1 [shape = 'u32[72,128]{1,0:T(1,128)}', space=vmem, size = 0x9000, scoped, tag = 'internal scratch']
  #allocation2 [shape = 'f32[16,32]{1,0:T(8,128)}', space=vmem, size = 0x2000, scoped, tag = 'scratch operand']
  %s0 = inlined_call_operand.vmem [shape: f32[16,64], index: 0, kind: input, shape index: {}]
  %s1 = inlined_call_operand.vmem [shape: bf16[2,2048], index: 1, kind: input, shape index: {}]
  %s2 = inlined_call_operand.vmem [shape: bf16[2048,32], index: 2, kind: input, shape index: {}]
  %s3 = inlined_call_operand.vmem [shape: f32[1,32], index: 3, kind: input, shape index: {}]
  %s4 = inlined_call_operand.vmem [shape: f32[64,128], index: 4, kind: input, shape index: {}]
  %s5 = inlined_call_operand.vmem [shape: f32[1,128], index: 5, kind: input, shape index: {}]
  %s6 = inlined_call_operand.vmem [shape: f32[16,64], index: 6, kind: input, shape index: {}]
  %s7 = inlined_call_operand.vmem [shape: f32[16,64], index: 7, kind: input, shape index: {}]
  %s8 = inlined_call_operand.vmem [shape: f32[32,128], index: 8, kind: input, shape index: {}]
  %s9 = inlined_call_operand.vmem [shape: f32[1,128], index: 9, kind: input, shape index: {}]
  %s10 = inlined_call_operand.vmem [shape: f32[128,128], index: 10, kind: input, shape index: {}]
  %s11 = inlined_call_operand.vmem [shape: f32[1,128], index: 11, kind: input, shape index: {}]
  %s12 = inlined_call_operand.vmem [shape: f32[16,128], index: 12, kind: output, shape index: {}]
  %s13 = sld [smem:[#allocation0]]
  $region58: #{forward.1} parent=0
    _
  %s15 = ssub.s32 1, %s13
  %s16 = scalar_select 0, %s15, %s13
  // Predicated region
  $region2: #{forward.1} parent=0 // pred_check
    _
  $region3: #{forward.1} parent=0 // pred_check_branch
    %18 = sbr.rel (0) target = $region5
  $region4: #{forward.1} parent=0 // pred_region
    _
  $region5: #{forward.1} parent=0 // pred_fallthru
    _
  // Predicated region
  $region6: #{forward.1} parent=0 // pred_check
    _
  $region7: #{forward.1} parent=0 // pred_check_branch
    %20 = sbr.rel (0) target = $region9
  $region8: #{forward.1} parent=0 // pred_region
    _
  $region9: #{forward.1} parent=0 // pred_fallthru
    _
  // Predicated region
  $region10: #{forward.1} parent=0 // pred_check
    _
  $region11: #{forward.1} parent=0 // pred_check_branch
    %22 = sbr.rel (0) target = $region13
  $region12: #{forward.1} parent=0 // pred_region
    _
  $region13: #{forward.1} parent=0 // pred_fallthru
    _
  // Predicated region
  $region14: #{forward.1} parent=0 // pred_check
    _
  $region15: #{forward.1} parent=0 // pred_check_branch
    %24 = sbr.rel (0) target = $region17
  $region16: #{forward.1} parent=0 // pred_region
    _
  $region17: #{forward.1} parent=0 // pred_fallthru
    _
  // Predicated region
  $region18: #{forward.1} parent=0 // pred_check
    _
  $region19: #{forward.1} parent=0 // pred_check_branch
    %26 = sbr.rel (0) target = $region21
  $region20: #{forward.1} parent=0 // pred_region
    _
  $region21: #{forward.1} parent=0 // pred_fallthru
    _
  // Predicated region
  $region22: #{forward.1} parent=0 // pred_check
    _
  $region23: #{forward.1} parent=0 // pred_check_branch
    %28 = sbr.rel (0) target = $region25
  $region24: #{forward.1} parent=0 // pred_region
    _
  $region25: #{forward.1} parent=0 // pred_fallthru
    _
  // Predicated region
  $region26: #{forward.1} parent=0 // pred_check
    _
  $region27: #{forward.1} parent=0 // pred_check_branch
    %30 = sbr.rel (0) target = $region29
  $region28: #{forward.1} parent=0 // pred_region
    _
  $region29: #{forward.1} parent=0 // pred_fallthru
    _
  // Predicated region
  $region30: #{forward.1} parent=0 // pred_check
    _
  $region31: #{forward.1} parent=0 // pred_check_branch
    %32 = sbr.rel (0) target = $region33
  $region32: #{forward.1} parent=0 // pred_region
    _
  $region33: #{forward.1} parent=0 // pred_fallthru
    _
  // Predicated region
  $region34: #{forward.1} parent=0 // pred_check
    _
  $region35: #{forward.1} parent=0 // pred_check_branch
    %34 = sbr.rel (0) target = $region37
  $region36: #{forward.1} parent=0 // pred_region
    _
  $region37: #{forward.1} parent=0 // pred_fallthru
    _
  // Predicated region
  $region38: #{forward.1} parent=0 // pred_check
    _
  $region39: #{forward.1} parent=0 // pred_check_branch
    %36 = sbr.rel (0) target = $region41
  $region40: #{forward.1} parent=0 // pred_region
    _
  $region41: #{forward.1} parent=0 // pred_fallthru
    _
  // Predicated region
  $region42: #{forward.1} parent=0 // pred_check
    _
  $region43: #{forward.1} parent=0 // pred_check_branch
    %38 = sbr.rel (0) target = $region45
  $region44: #{forward.1} parent=0 // pred_region
    _
  $region45: #{forward.1} parent=0 // pred_fallthru
    _
  // Predicated region
  $region46: #{forward.1} parent=0 // pred_check
    _
  $region47: #{forward.1} parent=0 // pred_check_branch
    %40 = sbr.rel (0) target = $region49
  $region48: #{forward.1} parent=0 // pred_region
    _
  $region49: #{forward.1} parent=0 // pred_fallthru
    _
  %v41 = vld [vmem:[%s1] sm:$0xff]
  %v42 = vld [vmem:[%s1 + $0x8] sm:$0xff]
  %v43 = vld [vmem:[%s2] sm:$0xf]
  %v44 = vld [vmem:[%s2 + $0x4] sm:$0xf]
  %v45 = vld [vmem:[%s2 + $0x8] sm:$0xf]
  %v46 = vld [vmem:[%s2 + $0xc] sm:$0xf]
  %v47 = vld [vmem:[%s2 + $0x10] sm:$0xf]
  %v48 = vld [vmem:[%s2 + $0x14] sm:$0xf]
  %v49 = vld [vmem:[%s2 + $0x18] sm:$0xf]
  %v50 = vld [vmem:[%s2 + $0x1c] sm:$0xf]
  %v51 = vld [vmem:[%s2 + $0x20] sm:$0xf]
  %v52 = vld [vmem:[%s2 + $0x24] sm:$0xf]
  %v53 = vld [vmem:[%s2 + $0x28] sm:$0xf]
  %v54 = vld [vmem:[%s2 + $0x2c] sm:$0xf]
  %v55 = vld [vmem:[%s2 + $0x30] sm:$0xf]
  %v56 = vld [vmem:[%s2 + $0x34] sm:$0xf]
  %v57 = vld [vmem:[%s2 + $0x38] sm:$0xf]
  %v58 = vld [vmem:[%s2 + $0x3c] sm:$0xf]
  %v59 = vld [vmem:[%s2 + $0x40] sm:$0xf]
  %v60 = vld [vmem:[%s2 + $0x44] sm:$0xf]
  %v61 = vld [vmem:[%s2 + $0x48] sm:$0xf]
  %v62 = vld [vmem:[%s2 + $0x4c] sm:$0xf]
  %v63 = vld [vmem:[%s2 + $0x50] sm:$0xf]
  %v64 = vld [vmem:[%s2 + $0x54] sm:$0xf]
  %v65 = vld [vmem:[%s2 + $0x58] sm:$0xf]
  %v66 = vld [vmem:[%s2 + $0x5c] sm:$0xf]
  %v67 = vld [vmem:[%s2 + $0x60] sm:$0xf]
  %v68 = vld [vmem:[%s2 + $0x64] sm:$0xf]
  %v69 = vld [vmem:[%s2 + $0x68] sm:$0xf]
  %v70 = vld [vmem:[%s2 + $0x6c] sm:$0xf]
  %v71 = vld [vmem:[%s2 + $0x70] sm:$0xf]
  %v72 = vld [vmem:[%s2 + $0x74] sm:$0xf]
  %v73 = vld [vmem:[%s2 + $0x78] sm:$0xf]
  %v74 = vld [vmem:[%s2 + $0x7c] sm:$0xf]
  %v75 = vld [vmem:[%s2 + $0x80] sm:$0xf]
  %v76 = vld [vmem:[%s2 + $0x84] sm:$0xf]
  %v77 = vld [vmem:[%s2 + $0x88] sm:$0xf]
  %v78 = vld [vmem:[%s2 + $0x8c] sm:$0xf]
  %v79 = vld [vmem:[%s2 + $0x90] sm:$0xf]
  %v80 = vld [vmem:[%s2 + $0x94] sm:$0xf]
  %v81 = vld [vmem:[%s2 + $0x98] sm:$0xf]
  %v82 = vld [vmem:[%s2 + $0x9c] sm:$0xf]
  %v83 = vld [vmem:[%s2 + $0xa0] sm:$0xf]
  %v84 = vld [vmem:[%s2 + $0xa4] sm:$0xf]
  %v85 = vld [vmem:[%s2 + $0xa8] sm:$0xf]
  %v86 = vld [vmem:[%s2 + $0xac] sm:$0xf]
  %v87 = vld [vmem:[%s2 + $0xb0] sm:$0xf]
  %v88 = vld [vmem:[%s2 + $0xb4] sm:$0xf]
  %v89 = vld [vmem:[%s2 + $0xb8] sm:$0xf]
  %v90 = vld [vmem:[%s2 + $0xbc] sm:$0xf]
  %v91 = vld [vmem:[%s2 + $0xc0] sm:$0xf]
  %v92 = vld [vmem:[%s2 + $0xc4] sm:$0xf]
  %v93 = vld [vmem:[%s2 + $0xc8] sm:$0xf]
  %v94 = vld [vmem:[%s2 + $0xcc] sm:$0xf]
  %v95 = vld [vmem:[%s2 + $0xd0] sm:$0xf]
  %v96 = vld [vmem:[%s2 + $0xd4] sm:$0xf]
  %v97 = vld [vmem:[%s2 + $0xd8] sm:$0xf]
  %v98 = vld [vmem:[%s2 + $0xdc] sm:$0xf]
  %v99 = vld [vmem:[%s2 + $0xe0] sm:$0xf]
  %v100 = vld [vmem:[%s2 + $0xe4] sm:$0xf]
  %v101 = vld [vmem:[%s2 + $0xe8] sm:$0xf]
  %v102 = vld [vmem:[%s2 + $0xec] sm:$0xf]
  %v103 = vld [vmem:[%s2 + $0xf0] sm:$0xf]
  %v104 = vld [vmem:[%s2 + $0xf4] sm:$0xf]
  %v105 = vld [vmem:[%s2 + $0xf8] sm:$0xf]
  %v106 = vld [vmem:[%s2 + $0xfc] sm:$0xf]
  %v107 = vld [vmem:[%s2 + $0x100] sm:$0xf]
  %v108 = vld [vmem:[%s2 + $0x104] sm:$0xf]
  %v109 = vld [vmem:[%s2 + $0x108] sm:$0xf]
  %v110 = vld [vmem:[%s2 + $0x10c] sm:$0xf]
  %v111 = vld [vmem:[%s2 + $0x110] sm:$0xf]
  %v112 = vld [vmem:[%s2 + $0x114] sm:$0xf]
  %v113 = vld [vmem:[%s2 + $0x118] sm:$0xf]
  %v114 = vld [vmem:[%s2 + $0x11c] sm:$0xf]
  %v115 = vld [vmem:[%s2 + $0x120] sm:$0xf]
  %v116 = vld [vmem:[%s2 + $0x124] sm:$0xf]
  %v117 = vld [vmem:[%s2 + $0x128] sm:$0xf]
  %v118 = vld [vmem:[%s2 + $0x12c] sm:$0xf]
  %v119 = vld [vmem:[%s2 + $0x130] sm:$0xf]
  %v120 = vld [vmem:[%s2 + $0x134] sm:$0xf]
  %v121 = vld [vmem:[%s2 + $0x138] sm:$0xf]
  %v122 = vld [vmem:[%s2 + $0x13c] sm:$0xf]
  %v123 = vld [vmem:[%s2 + $0x140] sm:$0xf]
  %v124 = vld [vmem:[%s2 + $0x144] sm:$0xf]
  %v125 = vld [vmem:[%s2 + $0x148] sm:$0xf]
  %v126 = vld [vmem:[%s2 + $0x14c] sm:$0xf]
  %v127 = vld [vmem:[%s2 + $0x150] sm:$0xf]
  %v128 = vld [vmem:[%s2 + $0x154] sm:$0xf]
  %v129 = vld [vmem:[%s2 + $0x158] sm:$0xf]
  %v130 = vld [vmem:[%s2 + $0x15c] sm:$0xf]
  %v131 = vld [vmem:[%s2 + $0x160] sm:$0xf]
  %v132 = vld [vmem:[%s2 + $0x164] sm:$0xf]
  %v133 = vld [vmem:[%s2 + $0x168] sm:$0xf]
  %v134 = vld [vmem:[%s2 + $0x16c] sm:$0xf]
  %v135 = vld [vmem:[%s2 + $0x170] sm:$0xf]
  %v136 = vld [vmem:[%s2 + $0x174] sm:$0xf]
  %v137 = vld [vmem:[%s2 + $0x178] sm:$0xf]
  %v138 = vld [vmem:[%s2 + $0x17c] sm:$0xf]
  %v139 = vld [vmem:[%s2 + $0x180] sm:$0xf]
  %v140 = vld [vmem:[%s2 + $0x184] sm:$0xf]
  %v141 = vld [vmem:[%s2 + $0x188] sm:$0xf]
  %v142 = vld [vmem:[%s2 + $0x18c] sm:$0xf]
  %v143 = vld [vmem:[%s2 + $0x190] sm:$0xf]
  %v144 = vld [vmem:[%s2 + $0x194] sm:$0xf]
  %v145 = vld [vmem:[%s2 + $0x198] sm:$0xf]
  %v146 = vld [vmem:[%s2 + $0x19c] sm:$0xf]
  %v147 = vld [vmem:[%s2 + $0x1a0] sm:$0xf]
  %v148 = vld [vmem:[%s2 + $0x1a4] sm:$0xf]
  %v149 = vld [vmem:[%s2 + $0x1a8] sm:$0xf]
  %v150 = vld [vmem:[%s2 + $0x1ac] sm:$0xf]
  %v151 = vld [vmem:[%s2 + $0x1b0] sm:$0xf]
  %v152 = vld [vmem:[%s2 + $0x1b4] sm:$0xf]
  %v153 = vld [vmem:[%s2 + $0x1b8] sm:$0xf]
  %v154 = vld [vmem:[%s2 + $0x1bc] sm:$0xf]
  %v155 = vld [vmem:[%s2 + $0x1c0] sm:$0xf]
  %v156 = vld [vmem:[%s2 + $0x1c4] sm:$0xf]
  %v157 = vld [vmem:[%s2 + $0x1c8] sm:$0xf]
  %v158 = vld [vmem:[%s2 + $0x1cc] sm:$0xf]
  %v159 = vld [vmem:[%s2 + $0x1d0] sm:$0xf]
  %v160 = vld [vmem:[%s2 + $0x1d4] sm:$0xf]
  %v161 = vld [vmem:[%s2 + $0x1d8] sm:$0xf]
  %v162 = vld [vmem:[%s2 + $0x1dc] sm:$0xf]
  %v163 = vld [vmem:[%s2 + $0x1e0] sm:$0xf]
  %v164 = vld [vmem:[%s2 + $0x1e4] sm:$0xf]
  %v165 = vld [vmem:[%s2 + $0x1e8] sm:$0xf]
  %v166 = vld [vmem:[%s2 + $0x1ec] sm:$0xf]
  %v167 = vld [vmem:[%s2 + $0x1f0] sm:$0xf]
  %v168 = vld [vmem:[%s2 + $0x1f4] sm:$0xf]
  %v169 = vld [vmem:[%s2 + $0x1f8] sm:$0xf]
  %v170 = vld [vmem:[%s2 + $0x1fc] sm:$0xf]
  %v171 = vld [vmem:[%s2 + $0x200] sm:$0xf]
  %v172 = vld [vmem:[%s2 + $0x204] sm:$0xf]
  %v173 = vld [vmem:[%s2 + $0x208] sm:$0xf]
  %v174 = vld [vmem:[%s2 + $0x20c] sm:$0xf]
  %v175 = vld [vmem:[%s2 + $0x210] sm:$0xf]
  %v176 = vld [vmem:[%s2 + $0x214] sm:$0xf]
  %v177 = vld [vmem:[%s2 + $0x218] sm:$0xf]
  %v178 = vld [vmem:[%s2 + $0x21c] sm:$0xf]
  %v179 = vld [vmem:[%s2 + $0x220] sm:$0xf]
  %v180 = vld [vmem:[%s2 + $0x224] sm:$0xf]
  %v181 = vld [vmem:[%s2 + $0x228] sm:$0xf]
  %v182 = vld [vmem:[%s2 + $0x22c] sm:$0xf]
  %v183 = vld [vmem:[%s2 + $0x230] sm:$0xf]
  %v184 = vld [vmem:[%s2 + $0x234] sm:$0xf]
  %v185 = vld [vmem:[%s2 + $0x238] sm:$0xf]
  %v186 = vld [vmem:[%s2 + $0x23c] sm:$0xf]
  %v187 = vld [vmem:[%s2 + $0x240] sm:$0xf]
  %v188 = vld [vmem:[%s2 + $0x244] sm:$0xf]
  %v189 = vld [vmem:[%s2 + $0x248] sm:$0xf]
  %v190 = vld [vmem:[%s2 + $0x24c] sm:$0xf]
  %v191 = vld [vmem:[%s2 + $0x250] sm:$0xf]
  %v192 = vld [vmem:[%s2 + $0x254] sm:$0xf]
  %v193 = vld [vmem:[%s2 + $0x258] sm:$0xf]
  %v194 = vld [vmem:[%s2 + $0x25c] sm:$0xf]
  %v195 = vld [vmem:[%s2 + $0x260] sm:$0xf]
  %v196 = vld [vmem:[%s2 + $0x264] sm:$0xf]
  %v197 = vld [vmem:[%s2 + $0x268] sm:$0xf]
  %v198 = vld [vmem:[%s2 + $0x26c] sm:$0xf]
  %v199 = vld [vmem:[%s2 + $0x270] sm:$0xf]
  %v200 = vld [vmem:[%s2 + $0x274] sm:$0xf]
  %v201 = vld [vmem:[%s2 + $0x278] sm:$0xf]
  %v202 = vld [vmem:[%s2 + $0x27c] sm:$0xf]
  %v203 = vld [vmem:[%s2 + $0x280] sm:$0xf]
  %v204 = vld [vmem:[%s2 + $0x284] sm:$0xf]
  %v205 = vld [vmem:[%s2 + $0x288] sm:$0xf]
  %v206 = vld [vmem:[%s2 + $0x28c] sm:$0xf]
  %v207 = vld [vmem:[%s2 + $0x290] sm:$0xf]
  %v208 = vld [vmem:[%s2 + $0x294] sm:$0xf]
  %v209 = vld [vmem:[%s2 + $0x298] sm:$0xf]
  %v210 = vld [vmem:[%s2 + $0x29c] sm:$0xf]
  %v211 = vld [vmem:[%s2 + $0x2a0] sm:$0xf]
  %v212 = vld [vmem:[%s2 + $0x2a4] sm:$0xf]
  %v213 = vld [vmem:[%s2 + $0x2a8] sm:$0xf]
  %v214 = vld [vmem:[%s2 + $0x2ac] sm:$0xf]
  %v215 = vld [vmem:[%s2 + $0x2b0] sm:$0xf]
  %v216 = vld [vmem:[%s2 + $0x2b4] sm:$0xf]
  %v217 = vld [vmem:[%s2 + $0x2b8] sm:$0xf]
  %v218 = vld [vmem:[%s2 + $0x2bc] sm:$0xf]
  %v219 = vld [vmem:[%s2 + $0x2c0] sm:$0xf]
  %v220 = vld [vmem:[%s2 + $0x2c4] sm:$0xf]
  %v221 = vld [vmem:[%s2 + $0x2c8] sm:$0xf]
  %v222 = vld [vmem:[%s2 + $0x2cc] sm:$0xf]
  %v223 = vld [vmem:[%s2 + $0x2d0] sm:$0xf]
  %v224 = vld [vmem:[%s2 + $0x2d4] sm:$0xf]
  %v225 = vld [vmem:[%s2 + $0x2d8] sm:$0xf]
  %v226 = vld [vmem:[%s2 + $0x2dc] sm:$0xf]
  %v227 = vld [vmem:[%s2 + $0x2e0] sm:$0xf]
  %v228 = vld [vmem:[%s2 + $0x2e4] sm:$0xf]
  %v229 = vld [vmem:[%s2 + $0x2e8] sm:$0xf]
  %v230 = vld [vmem:[%s2 + $0x2ec] sm:$0xf]
  %v231 = vld [vmem:[%s2 + $0x2f0] sm:$0xf]
  %v232 = vld [vmem:[%s2 + $0x2f4] sm:$0xf]
  %v233 = vld [vmem:[%s2 + $0x2f8] sm:$0xf]
  %v234 = vld [vmem:[%s2 + $0x2fc] sm:$0xf]
  %v235 = vld [vmem:[%s2 + $0x300] sm:$0xf]
  %v236 = vld [vmem:[%s2 + $0x304] sm:$0xf]
  %v237 = vld [vmem:[%s2 + $0x308] sm:$0xf]
  %v238 = vld [vmem:[%s2 + $0x30c] sm:$0xf]
  %v239 = vld [vmem:[%s2 + $0x310] sm:$0xf]
  %v240 = vld [vmem:[%s2 + $0x314] sm:$0xf]
  %v241 = vld [vmem:[%s2 + $0x318] sm:$0xf]
  %v242 = vld [vmem:[%s2 + $0x31c] sm:$0xf]
  %v243 = vld [vmem:[%s2 + $0x320] sm:$0xf]
  %v244 = vld [vmem:[%s2 + $0x324] sm:$0xf]
  %v245 = vld [vmem:[%s2 + $0x328] sm:$0xf]
  %v246 = vld [vmem:[%s2 + $0x32c] sm:$0xf]
  %v247 = vld [vmem:[%s2 + $0x330] sm:$0xf]
  %v248 = vld [vmem:[%s2 + $0x334] sm:$0xf]
  %v249 = vld [vmem:[%s2 + $0x338] sm:$0xf]
  %v250 = vld [vmem:[%s2 + $0x33c] sm:$0xf]
  %v251 = vld [vmem:[%s2 + $0x340] sm:$0xf]
  %v252 = vld [vmem:[%s2 + $0x344] sm:$0xf]
  %v253 = vld [vmem:[%s2 + $0x348] sm:$0xf]
  %v254 = vld [vmem:[%s2 + $0x34c] sm:$0xf]
  %v255 = vld [vmem:[%s2 + $0x350] sm:$0xf]
  %v256 = vld [vmem:[%s2 + $0x354] sm:$0xf]
  %v257 = vld [vmem:[%s2 + $0x358] sm:$0xf]
  %v258 = vld [vmem:[%s2 + $0x35c] sm:$0xf]
  %v259 = vld [vmem:[%s2 + $0x360] sm:$0xf]
  %v260 = vld [vmem:[%s2 + $0x364] sm:$0xf]
  %v261 = vld [vmem:[%s2 + $0x368] sm:$0xf]
  %v262 = vld [vmem:[%s2 + $0x36c] sm:$0xf]
  %v263 = vld [vmem:[%s2 + $0x370] sm:$0xf]
  %v264 = vld [vmem:[%s2 + $0x374] sm:$0xf]
  %v265 = vld [vmem:[%s2 + $0x378] sm:$0xf]
  %v266 = vld [vmem:[%s2 + $0x37c] sm:$0xf]
  %v267 = vld [vmem:[%s2 + $0x380] sm:$0xf]
  %v268 = vld [vmem:[%s2 + $0x384] sm:$0xf]
  %v269 = vld [vmem:[%s2 + $0x388] sm:$0xf]
  %v270 = vld [vmem:[%s2 + $0x38c] sm:$0xf]
  %v271 = vld [vmem:[%s2 + $0x390] sm:$0xf]
  %v272 = vld [vmem:[%s2 + $0x394] sm:$0xf]
  %v273 = vld [vmem:[%s2 + $0x398] sm:$0xf]
  %v274 = vld [vmem:[%s2 + $0x39c] sm:$0xf]
  %v275 = vld [vmem:[%s2 + $0x3a0] sm:$0xf]
  %v276 = vld [vmem:[%s2 + $0x3a4] sm:$0xf]
  %v277 = vld [vmem:[%s2 + $0x3a8] sm:$0xf]
  %v278 = vld [vmem:[%s2 + $0x3ac] sm:$0xf]
  %v279 = vld [vmem:[%s2 + $0x3b0] sm:$0xf]
  %v280 = vld [vmem:[%s2 + $0x3b4] sm:$0xf]
  %v281 = vld [vmem:[%s2 + $0x3b8] sm:$0xf]
  %v282 = vld [vmem:[%s2 + $0x3bc] sm:$0xf]
  %v283 = vld [vmem:[%s2 + $0x3c0] sm:$0xf]
  %v284 = vld [vmem:[%s2 + $0x3c4] sm:$0xf]
  %v285 = vld [vmem:[%s2 + $0x3c8] sm:$0xf]
  %v286 = vld [vmem:[%s2 + $0x3cc] sm:$0xf]
  %v287 = vld [vmem:[%s2 + $0x3d0] sm:$0xf]
  %v288 = vld [vmem:[%s2 + $0x3d4] sm:$0xf]
  %v289 = vld [vmem:[%s2 + $0x3d8] sm:$0xf]
  %v290 = vld [vmem:[%s2 + $0x3dc] sm:$0xf]
  %v291 = vld [vmem:[%s2 + $0x3e0] sm:$0xf]
  %v292 = vld [vmem:[%s2 + $0x3e4] sm:$0xf]
  %v293 = vld [vmem:[%s2 + $0x3e8] sm:$0xf]
  %v294 = vld [vmem:[%s2 + $0x3ec] sm:$0xf]
  %v295 = vld [vmem:[%s2 + $0x3f0] sm:$0xf]
  %v296 = vld [vmem:[%s2 + $0x3f4] sm:$0xf]
  %v297 = vld [vmem:[%s2 + $0x3f8] sm:$0xf]
  %v298 = vld [vmem:[%s2 + $0x3fc] sm:$0xf]
  %v299 = vld [vmem:[%s3] sm:$0x1]
  %v301 = vperm.slane %v299, 0
  %304 = vst [vmem:[#allocation1] ss:$9 sm:$0xff] %v41
  %v305 = vld [vmem:[#allocation1] sm:$0xff]
  %v306 = vld [vmem:[#allocation1 + $0x9] sm:$0xff]
  %v307 = vld [vmem:[#allocation1 + $0x12] sm:$0xff]
  %v308 = vld [vmem:[#allocation1 + $0x1b] sm:$0xff]
  %v309 = vld [vmem:[#allocation1 + $0x24] sm:$0xff]
  %v310 = vld [vmem:[#allocation1 + $0x2d] sm:$0xff]
  %v311 = vld [vmem:[#allocation1 + $0x36] sm:$0xff]
  %v312 = vld [vmem:[#allocation1 + $0x3f] sm:$0xff]
  %314 = vst [vmem:[#allocation1] ss:$9 sm:$0xff] %v42
  %v315 = vld [vmem:[#allocation1] sm:$0xff]
  %v316 = vld [vmem:[#allocation1 + $0x9] sm:$0xff]
  %v317 = vld [vmem:[#allocation1 + $0x12] sm:$0xff]
  %v318 = vld [vmem:[#allocation1 + $0x1b] sm:$0xff]
  %v319 = vld [vmem:[#allocation1 + $0x24] sm:$0xff]
  %v320 = vld [vmem:[#allocation1 + $0x2d] sm:$0xff]
  %v321 = vld [vmem:[#allocation1 + $0x36] sm:$0xff]
  %v322 = vld [vmem:[#allocation1 + $0x3f] sm:$0xff]
  %v595 = vunpack.c.l.b16 %v43
  %v596 = vunpack.c.l.b16 %v44
  %v597 = vunpack.c.l.b16 %v45
  %v598 = vunpack.c.l.b16 %v46
  %v599 = vunpack.c.l.b16 %v47
  %v600 = vunpack.c.l.b16 %v48
  %v601 = vunpack.c.l.b16 %v49
  %v602 = vunpack.c.l.b16 %v50
  %v603 = vunpack.c.l.b16 %v51
  %v604 = vunpack.c.l.b16 %v52
  %v605 = vunpack.c.l.b16 %v53
  %v606 = vunpack.c.l.b16 %v54
  %v607 = vunpack.c.l.b16 %v55
  %v608 = vunpack.c.l.b16 %v56
  %v609 = vunpack.c.l.b16 %v57
  %v610 = vunpack.c.l.b16 %v58
  %v611 = vunpack.c.l.b16 %v59
  %v612 = vunpack.c.l.b16 %v60
  %v613 = vunpack.c.l.b16 %v61
  %v614 = vunpack.c.l.b16 %v62
  %v615 = vunpack.c.l.b16 %v63
  %v616 = vunpack.c.l.b16 %v64
  %v617 = vunpack.c.l.b16 %v65
  %v618 = vunpack.c.l.b16 %v66
  %v619 = vunpack.c.l.b16 %v67
  %v620 = vunpack.c.l.b16 %v68
  %v621 = vunpack.c.l.b16 %v69
  %v622 = vunpack.c.l.b16 %v70
  %v623 = vunpack.c.l.b16 %v71
  %v624 = vunpack.c.l.b16 %v72
  %v625 = vunpack.c.l.b16 %v73
  %v626 = vunpack.c.l.b16 %v74
  %v627 = vunpack.c.l.b16 %v75
  %v628 = vunpack.c.l.b16 %v76
  %v629 = vunpack.c.l.b16 %v77
  %v630 = vunpack.c.l.b16 %v78
  %v631 = vunpack.c.l.b16 %v79
  %v632 = vunpack.c.l.b16 %v80
  %v633 = vunpack.c.l.b16 %v81
  %v634 = vunpack.c.l.b16 %v82
  %v635 = vunpack.c.l.b16 %v83
  %v636 = vunpack.c.l.b16 %v84
  %v637 = vunpack.c.l.b16 %v85
  %v638 = vunpack.c.l.b16 %v86
  %v639 = vunpack.c.l.b16 %v87
  %v640 = vunpack.c.l.b16 %v88
  %v641 = vunpack.c.l.b16 %v89
  %v642 = vunpack.c.l.b16 %v90
  %v643 = vunpack.c.l.b16 %v91
  %v644 = vunpack.c.l.b16 %v92
  %v645 = vunpack.c.l.b16 %v93
  %v646 = vunpack.c.l.b16 %v94
  %v647 = vunpack.c.l.b16 %v95
  %v648 = vunpack.c.l.b16 %v96
  %v649 = vunpack.c.l.b16 %v97
  %v650 = vunpack.c.l.b16 %v98
  %v651 = vunpack.c.l.b16 %v99
  %v652 = vunpack.c.l.b16 %v100
  %v653 = vunpack.c.l.b16 %v101
  %v654 = vunpack.c.l.b16 %v102
  %v655 = vunpack.c.l.b16 %v103
  %v656 = vunpack.c.l.b16 %v104
  %v657 = vunpack.c.l.b16 %v105
  %v658 = vunpack.c.l.b16 %v106
  %v659 = vunpack.c.l.b16 %v107
  %v660 = vunpack.c.l.b16 %v108
  %v661 = vunpack.c.l.b16 %v109
  %v662 = vunpack.c.l.b16 %v110
  %v663 = vunpack.c.l.b16 %v111
  %v664 = vunpack.c.l.b16 %v112
  %v665 = vunpack.c.l.b16 %v113
  %v666 = vunpack.c.l.b16 %v114
  %v667 = vunpack.c.l.b16 %v115
  %v668 = vunpack.c.l.b16 %v116
  %v669 = vunpack.c.l.b16 %v117
  %v670 = vunpack.c.l.b16 %v118
  %v671 = vunpack.c.l.b16 %v119
  %v672 = vunpack.c.l.b16 %v120
  %v673 = vunpack.c.l.b16 %v121
  %v674 = vunpack.c.l.b16 %v122
  %v675 = vunpack.c.l.b16 %v123
  %v676 = vunpack.c.l.b16 %v124
  %v677 = vunpack.c.l.b16 %v125
  %v678 = vunpack.c.l.b16 %v126
  %v679 = vunpack.c.l.b16 %v127
  %v680 = vunpack.c.l.b16 %v128
  %v681 = vunpack.c.l.b16 %v129
  %v682 = vunpack.c.l.b16 %v130
  %v683 = vunpack.c.l.b16 %v131
  %v684 = vunpack.c.l.b16 %v132
  %v685 = vunpack.c.l.b16 %v133
  %v686 = vunpack.c.l.b16 %v134
  %v687 = vunpack.c.l.b16 %v135
  %v688 = vunpack.c.l.b16 %v136
  %v689 = vunpack.c.l.b16 %v137
  %v690 = vunpack.c.l.b16 %v138
  %v691 = vunpack.c.l.b16 %v139
  %v692 = vunpack.c.l.b16 %v140
  %v693 = vunpack.c.l.b16 %v141
  %v694 = vunpack.c.l.b16 %v142
  %v695 = vunpack.c.l.b16 %v143
  %v696 = vunpack.c.l.b16 %v144
  %v697 = vunpack.c.l.b16 %v145
  %v698 = vunpack.c.l.b16 %v146
  %v699 = vunpack.c.l.b16 %v147
  %v700 = vunpack.c.l.b16 %v148
  %v701 = vunpack.c.l.b16 %v149
  %v702 = vunpack.c.l.b16 %v150
  %v703 = vunpack.c.l.b16 %v151
  %v704 = vunpack.c.l.b16 %v152
  %v705 = vunpack.c.l.b16 %v153
  %v706 = vunpack.c.l.b16 %v154
  %v707 = vunpack.c.l.b16 %v155
  %v708 = vunpack.c.l.b16 %v156
  %v709 = vunpack.c.l.b16 %v157
  %v710 = vunpack.c.l.b16 %v158
  %v711 = vunpack.c.l.b16 %v159
  %v712 = vunpack.c.l.b16 %v160
  %v713 = vunpack.c.l.b16 %v161
  %v714 = vunpack.c.l.b16 %v162
  %v715 = vunpack.c.l.b16 %v163
  %v716 = vunpack.c.l.b16 %v164
  %v717 = vunpack.c.l.b16 %v165
  %v718 = vunpack.c.l.b16 %v166
  %v719 = vunpack.c.l.b16 %v167
  %v720 = vunpack.c.l.b16 %v168
  %v721 = vunpack.c.l.b16 %v169
  %v722 = vunpack.c.l.b16 %v170
  %v723 = vunpack.c.l.b16 %v171
  %v724 = vunpack.c.l.b16 %v172
  %v725 = vunpack.c.l.b16 %v173
  %v726 = vunpack.c.l.b16 %v174
  %v727 = vunpack.c.l.b16 %v175
  %v728 = vunpack.c.l.b16 %v176
  %v729 = vunpack.c.l.b16 %v177
  %v730 = vunpack.c.l.b16 %v178
  %v731 = vunpack.c.l.b16 %v179
  %v732 = vunpack.c.l.b16 %v180
  %v733 = vunpack.c.l.b16 %v181
  %v734 = vunpack.c.l.b16 %v182
  %v735 = vunpack.c.l.b16 %v183
  %v736 = vunpack.c.l.b16 %v184
  %v737 = vunpack.c.l.b16 %v185
  %v738 = vunpack.c.l.b16 %v186
  %v739 = vunpack.c.l.b16 %v187
  %v740 = vunpack.c.l.b16 %v188
  %v741 = vunpack.c.l.b16 %v189
  %v742 = vunpack.c.l.b16 %v190
  %v743 = vunpack.c.l.b16 %v191
  %v744 = vunpack.c.l.b16 %v192
  %v745 = vunpack.c.l.b16 %v193
  %v746 = vunpack.c.l.b16 %v194
  %v747 = vunpack.c.l.b16 %v195
  %v748 = vunpack.c.l.b16 %v196
  %v749 = vunpack.c.l.b16 %v197
  %v750 = vunpack.c.l.b16 %v198
  %v751 = vunpack.c.l.b16 %v199
  %v752 = vunpack.c.l.b16 %v200
  %v753 = vunpack.c.l.b16 %v201
  %v754 = vunpack.c.l.b16 %v202
  %v755 = vunpack.c.l.b16 %v203
  %v756 = vunpack.c.l.b16 %v204
  %v757 = vunpack.c.l.b16 %v205
  %v758 = vunpack.c.l.b16 %v206
  %v759 = vunpack.c.l.b16 %v207
  %v760 = vunpack.c.l.b16 %v208
  %v761 = vunpack.c.l.b16 %v209
  %v762 = vunpack.c.l.b16 %v210
  %v763 = vunpack.c.l.b16 %v211
  %v764 = vunpack.c.l.b16 %v212
  %v765 = vunpack.c.l.b16 %v213
  %v766 = vunpack.c.l.b16 %v214
  %v767 = vunpack.c.l.b16 %v215
  %v768 = vunpack.c.l.b16 %v216
  %v769 = vunpack.c.l.b16 %v217
  %v770 = vunpack.c.l.b16 %v218
  %v771 = vunpack.c.l.b16 %v219
  %v772 = vunpack.c.l.b16 %v220
  %v773 = vunpack.c.l.b16 %v221
  %v774 = vunpack.c.l.b16 %v222
  %v775 = vunpack.c.l.b16 %v223
  %v776 = vunpack.c.l.b16 %v224
  %v777 = vunpack.c.l.b16 %v225
  %v778 = vunpack.c.l.b16 %v226
  %v779 = vunpack.c.l.b16 %v227
  %v780 = vunpack.c.l.b16 %v228
  %v781 = vunpack.c.l.b16 %v229
  %v782 = vunpack.c.l.b16 %v230
  %v783 = vunpack.c.l.b16 %v231
  %v784 = vunpack.c.l.b16 %v232
  %v785 = vunpack.c.l.b16 %v233
  %v786 = vunpack.c.l.b16 %v234
  %v787 = vunpack.c.l.b16 %v235
  %v788 = vunpack.c.l.b16 %v236
  %v789 = vunpack.c.l.b16 %v237
  %v790 = vunpack.c.l.b16 %v238
  %v791 = vunpack.c.l.b16 %v239
  %v792 = vunpack.c.l.b16 %v240
  %v793 = vunpack.c.l.b16 %v241
  %v794 = vunpack.c.l.b16 %v242
  %v795 = vunpack.c.l.b16 %v243
  %v796 = vunpack.c.l.b16 %v244
  %v797 = vunpack.c.l.b16 %v245
  %v798 = vunpack.c.l.b16 %v246
  %v799 = vunpack.c.l.b16 %v247
  %v800 = vunpack.c.l.b16 %v248
  %v801 = vunpack.c.l.b16 %v249
  %v802 = vunpack.c.l.b16 %v250
  %v803 = vunpack.c.l.b16 %v251
  %v804 = vunpack.c.l.b16 %v252
  %v805 = vunpack.c.l.b16 %v253
  %v806 = vunpack.c.l.b16 %v254
  %v807 = vunpack.c.l.b16 %v255
  %v808 = vunpack.c.l.b16 %v256
  %v809 = vunpack.c.l.b16 %v257
  %v810 = vunpack.c.l.b16 %v258
  %v811 = vunpack.c.l.b16 %v259
  %v812 = vunpack.c.l.b16 %v260
  %v813 = vunpack.c.l.b16 %v261
  %v814 = vunpack.c.l.b16 %v262
  %v815 = vunpack.c.l.b16 %v263
  %v816 = vunpack.c.l.b16 %v264
  %v817 = vunpack.c.l.b16 %v265
  %v818 = vunpack.c.l.b16 %v266
  %v819 = vunpack.c.l.b16 %v267
  %v820 = vunpack.c.l.b16 %v268
  %v821 = vunpack.c.l.b16 %v269
  %v822 = vunpack.c.l.b16 %v270
  %v823 = vunpack.c.l.b16 %v271
  %v824 = vunpack.c.l.b16 %v272
  %v825 = vunpack.c.l.b16 %v273
  %v826 = vunpack.c.l.b16 %v274
  %v827 = vunpack.c.l.b16 %v275
  %v828 = vunpack.c.l.b16 %v276
  %v829 = vunpack.c.l.b16 %v277
  %v830 = vunpack.c.l.b16 %v278
  %v831 = vunpack.c.l.b16 %v279
  %v832 = vunpack.c.l.b16 %v280
  %v833 = vunpack.c.l.b16 %v281
  %v834 = vunpack.c.l.b16 %v282
  %v835 = vunpack.c.l.b16 %v283
  %v836 = vunpack.c.l.b16 %v284
  %v837 = vunpack.c.l.b16 %v285
  %v838 = vunpack.c.l.b16 %v286
  %v839 = vunpack.c.l.b16 %v287
  %v840 = vunpack.c.l.b16 %v288
  %v841 = vunpack.c.l.b16 %v289
  %v842 = vunpack.c.l.b16 %v290
  %v843 = vunpack.c.l.b16 %v291
  %v844 = vunpack.c.l.b16 %v292
  %v845 = vunpack.c.l.b16 %v293
  %v846 = vunpack.c.l.b16 %v294
  %v847 = vunpack.c.l.b16 %v295
  %v848 = vunpack.c.l.b16 %v296
  %v849 = vunpack.c.l.b16 %v297
  %v850 = vunpack.c.l.b16 %v298
  %v851 = vpack.c.b16 %v596, %v595
  %v852 = vpack.c.b16 %v598, %v597
  %v853 = vpack.c.b16 %v600, %v599
  %v854 = vpack.c.b16 %v602, %v601
  %v855 = vpack.c.b16 %v604, %v603
  %v856 = vpack.c.b16 %v606, %v605
  %v857 = vpack.c.b16 %v608, %v607
  %v858 = vpack.c.b16 %v610, %v609
  %v859 = vpack.c.b16 %v612, %v611
  %v860 = vpack.c.b16 %v614, %v613
  %v861 = vpack.c.b16 %v616, %v615
  %v862 = vpack.c.b16 %v618, %v617
  %v863 = vpack.c.b16 %v620, %v619
  %v864 = vpack.c.b16 %v622, %v621
  %v865 = vpack.c.b16 %v624, %v623
  %v866 = vpack.c.b16 %v626, %v625
  %v867 = vpack.c.b16 %v628, %v627
  %v868 = vpack.c.b16 %v630, %v629
  %v869 = vpack.c.b16 %v632, %v631
  %v870 = vpack.c.b16 %v634, %v633
  %v871 = vpack.c.b16 %v636, %v635
  %v872 = vpack.c.b16 %v638, %v637
  %v873 = vpack.c.b16 %v640, %v639
  %v874 = vpack.c.b16 %v642, %v641
  %v875 = vpack.c.b16 %v644, %v643
  %v876 = vpack.c.b16 %v646, %v645
  %v877 = vpack.c.b16 %v648, %v647
  %v878 = vpack.c.b16 %v650, %v649
  %v879 = vpack.c.b16 %v652, %v651
  %v880 = vpack.c.b16 %v654, %v653
  %v881 = vpack.c.b16 %v656, %v655
  %v882 = vpack.c.b16 %v658, %v657
  %v883 = vpack.c.b16 %v660, %v659
  %v884 = vpack.c.b16 %v662, %v661
  %v885 = vpack.c.b16 %v664, %v663
  %v886 = vpack.c.b16 %v666, %v665
  %v887 = vpack.c.b16 %v668, %v667
  %v888 = vpack.c.b16 %v670, %v669
  %v889 = vpack.c.b16 %v672, %v671
  %v890 = vpack.c.b16 %v674, %v673
  %v891 = vpack.c.b16 %v676, %v675
  %v892 = vpack.c.b16 %v678, %v677
  %v893 = vpack.c.b16 %v680, %v679
  %v894 = vpack.c.b16 %v682, %v681
  %v895 = vpack.c.b16 %v684, %v683
  %v896 = vpack.c.b16 %v686, %v685
  %v897 = vpack.c.b16 %v688, %v687
  %v898 = vpack.c.b16 %v690, %v689
  %v899 = vpack.c.b16 %v692, %v691
  %v900 = vpack.c.b16 %v694, %v693
  %v901 = vpack.c.b16 %v696, %v695
  %v902 = vpack.c.b16 %v698, %v697
  %v903 = vpack.c.b16 %v700, %v699
  %v904 = vpack.c.b16 %v702, %v701
  %v905 = vpack.c.b16 %v704, %v703
  %v906 = vpack.c.b16 %v706, %v705
  %v907 = vpack.c.b16 %v708, %v707
  %v908 = vpack.c.b16 %v710, %v709
  %v909 = vpack.c.b16 %v712, %v711
  %v910 = vpack.c.b16 %v714, %v713
  %v911 = vpack.c.b16 %v716, %v715
  %v912 = vpack.c.b16 %v718, %v717
  %v913 = vpack.c.b16 %v720, %v719
  %v914 = vpack.c.b16 %v722, %v721
  %v915 = vpack.c.b16 %v724, %v723
  %v916 = vpack.c.b16 %v726, %v725
  %v917 = vpack.c.b16 %v728, %v727
  %v918 = vpack.c.b16 %v730, %v729
  %v919 = vpack.c.b16 %v732, %v731
  %v920 = vpack.c.b16 %v734, %v733
  %v921 = vpack.c.b16 %v736, %v735
  %v922 = vpack.c.b16 %v738, %v737
  %v923 = vpack.c.b16 %v740, %v739
  %v924 = vpack.c.b16 %v742, %v741
  %v925 = vpack.c.b16 %v744, %v743
  %v926 = vpack.c.b16 %v746, %v745
  %v927 = vpack.c.b16 %v748, %v747
  %v928 = vpack.c.b16 %v750, %v749
  %v929 = vpack.c.b16 %v752, %v751
  %v930 = vpack.c.b16 %v754, %v753
  %v931 = vpack.c.b16 %v756, %v755
  %v932 = vpack.c.b16 %v758, %v757
  %v933 = vpack.c.b16 %v760, %v759
  %v934 = vpack.c.b16 %v762, %v761
  %v935 = vpack.c.b16 %v764, %v763
  %v936 = vpack.c.b16 %v766, %v765
  %v937 = vpack.c.b16 %v768, %v767
  %v938 = vpack.c.b16 %v770, %v769
  %v939 = vpack.c.b16 %v772, %v771
  %v940 = vpack.c.b16 %v774, %v773
  %v941 = vpack.c.b16 %v776, %v775
  %v942 = vpack.c.b16 %v778, %v777
  %v943 = vpack.c.b16 %v780, %v779
  %v944 = vpack.c.b16 %v782, %v781
  %v945 = vpack.c.b16 %v784, %v783
  %v946 = vpack.c.b16 %v786, %v785
  %v947 = vpack.c.b16 %v788, %v787
  %v948 = vpack.c.b16 %v790, %v789
  %v949 = vpack.c.b16 %v792, %v791
  %v950 = vpack.c.b16 %v794, %v793
  %v951 = vpack.c.b16 %v796, %v795
  %v952 = vpack.c.b16 %v798, %v797
  %v953 = vpack.c.b16 %v800, %v799
  %v954 = vpack.c.b16 %v802, %v801
  %v955 = vpack.c.b16 %v804, %v803
  %v956 = vpack.c.b16 %v806, %v805
  %v957 = vpack.c.b16 %v808, %v807
  %v958 = vpack.c.b16 %v810, %v809
  %v959 = vpack.c.b16 %v812, %v811
  %v960 = vpack.c.b16 %v814, %v813
  %v961 = vpack.c.b16 %v816, %v815
  %v962 = vpack.c.b16 %v818, %v817
  %v963 = vpack.c.b16 %v820, %v819
  %v964 = vpack.c.b16 %v822, %v821
  %v965 = vpack.c.b16 %v824, %v823
  %v966 = vpack.c.b16 %v826, %v825
  %v967 = vpack.c.b16 %v828, %v827
  %v968 = vpack.c.b16 %v830, %v829
  %v969 = vpack.c.b16 %v832, %v831
  %v970 = vpack.c.b16 %v834, %v833
  %v971 = vpack.c.b16 %v836, %v835
  %v972 = vpack.c.b16 %v838, %v837
  %v973 = vpack.c.b16 %v840, %v839
  %v974 = vpack.c.b16 %v842, %v841
  %v975 = vpack.c.b16 %v844, %v843
  %v976 = vpack.c.b16 %v846, %v845
  %v977 = vpack.c.b16 %v848, %v847
  %v978 = vpack.c.b16 %v850, %v849
  %1107 = vmatpush.bf16.msra.mxu0 %v858
  %1108 = vmatpush.bf16.msra.mxu0 %v857
  %1109 = vmatpush.bf16.msra.mxu0 %v856
  %1110 = vmatpush.bf16.msra.mxu0 %v855
  %1111 = vmatpush.bf16.msra.mxu0 %v854
  %1112 = vmatpush.bf16.msra.mxu0 %v853
  %1113 = vmatpush.bf16.msra.mxu0 %v852
  %1114 = vmatpush.bf16.msra.mxu0 %v851
  %1115 = vmatmul.bf16.gmra.mxu0 %v305
  %v1116 = vpop.f32.mrf.mxu0
  %v1117 = vadd.f32 %v301, %v1116
  %v1118 = vpop.f32.mrf.mxu0
  %1119 = vdwg.mxu0
  %1120 = vmatpush.bf16.msra.mxu0 %v866
  %1121 = vmatpush.bf16.msra.mxu0 %v865
  %1122 = vmatpush.bf16.msra.mxu0 %v864
  %1123 = vmatpush.bf16.msra.mxu0 %v863
  %1124 = vmatpush.bf16.msra.mxu0 %v862
  %1125 = vmatpush.bf16.msra.mxu0 %v861
  %1126 = vmatpush.bf16.msra.mxu0 %v860
  %1127 = vmatpush.bf16.msra.mxu0 %v859
  %1128 = vmatmul.bf16.gmra.mxu0 %v306
  %v1129 = vpop.f32.mrf.mxu0
  %v1130 = vadd.f32 %v1117, %v1129
  %v1131 = vpop.f32.mrf.mxu0
  %1132 = vdwg.mxu0
  %1133 = vmatpush.bf16.msra.mxu0 %v874
  %1134 = vmatpush.bf16.msra.mxu0 %v873
  %1135 = vmatpush.bf16.msra.mxu0 %v872
  %1136 = vmatpush.bf16.msra.mxu0 %v871
  %1137 = vmatpush.bf16.msra.mxu0 %v870
  %1138 = vmatpush.bf16.msra.mxu0 %v869
  %1139 = vmatpush.bf16.msra.mxu0 %v868
  %1140 = vmatpush.bf16.msra.mxu0 %v867
  %1141 = vmatmul.bf16.gmra.mxu0 %v307
  %v1142 = vpop.f32.mrf.mxu0
  %v1143 = vadd.f32 %v1130, %v1142
  %v1144 = vpop.f32.mrf.mxu0
  %1145 = vdwg.mxu0
  %1146 = vmatpush.bf16.msra.mxu0 %v882
  %1147 = vmatpush.bf16.msra.mxu0 %v881
  %1148 = vmatpush.bf16.msra.mxu0 %v880
  %1149 = vmatpush.bf16.msra.mxu0 %v879
  %1150 = vmatpush.bf16.msra.mxu0 %v878
  %1151 = vmatpush.bf16.msra.mxu0 %v877
  %1152 = vmatpush.bf16.msra.mxu0 %v876
  %1153 = vmatpush.bf16.msra.mxu0 %v875
  %1154 = vmatmul.bf16.gmra.mxu0 %v308
  %v1155 = vpop.f32.mrf.mxu0
  %v1156 = vadd.f32 %v1143, %v1155
  %v1157 = vpop.f32.mrf.mxu0
  %1158 = vdwg.mxu0
  %1159 = vmatpush.bf16.msra.mxu0 %v890
  %1160 = vmatpush.bf16.msra.mxu0 %v889
  %1161 = vmatpush.bf16.msra.mxu0 %v888
  %1162 = vmatpush.bf16.msra.mxu0 %v887
  %1163 = vmatpush.bf16.msra.mxu0 %v886
  %1164 = vmatpush.bf16.msra.mxu0 %v885
  %1165 = vmatpush.bf16.msra.mxu0 %v884
  %1166 = vmatpush.bf16.msra.mxu0 %v883
  %1167 = vmatmul.bf16.gmra.mxu0 %v309
  %v1168 = vpop.f32.mrf.mxu0
  %v1169 = vadd.f32 %v1156, %v1168
  %v1170 = vpop.f32.mrf.mxu0
  %1171 = vdwg.mxu0
  %1172 = vmatpush.bf16.msra.mxu0 %v898
  %1173 = vmatpush.bf16.msra.mxu0 %v897
  %1174 = vmatpush.bf16.msra.mxu0 %v896
  %1175 = vmatpush.bf16.msra.mxu0 %v895
  %1176 = vmatpush.bf16.msra.mxu0 %v894
  %1177 = vmatpush.bf16.msra.mxu0 %v893
  %1178 = vmatpush.bf16.msra.mxu0 %v892
  %1179 = vmatpush.bf16.msra.mxu0 %v891
  %1180 = vmatmul.bf16.gmra.mxu0 %v310
  %v1181 = vpop.f32.mrf.mxu0
  %v1182 = vadd.f32 %v1169, %v1181
  %v1183 = vpop.f32.mrf.mxu0
  %1184 = vdwg.mxu0
  %1185 = vmatpush.bf16.msra.mxu0 %v906
  %1186 = vmatpush.bf16.msra.mxu0 %v905
  %1187 = vmatpush.bf16.msra.mxu0 %v904
  %1188 = vmatpush.bf16.msra.mxu0 %v903
  %1189 = vmatpush.bf16.msra.mxu0 %v902
  %1190 = vmatpush.bf16.msra.mxu0 %v901
  %1191 = vmatpush.bf16.msra.mxu0 %v900
  %1192 = vmatpush.bf16.msra.mxu0 %v899
  %1193 = vmatmul.bf16.gmra.mxu0 %v311
  %v1194 = vpop.f32.mrf.mxu0
  %v1195 = vadd.f32 %v1182, %v1194
  %v1196 = vpop.f32.mrf.mxu0
  %1197 = vdwg.mxu0
  %1198 = vmatpush.bf16.msra.mxu0 %v914
  %1199 = vmatpush.bf16.msra.mxu0 %v913
  %1200 = vmatpush.bf16.msra.mxu0 %v912
  %1201 = vmatpush.bf16.msra.mxu0 %v911
  %1202 = vmatpush.bf16.msra.mxu0 %v910
  %1203 = vmatpush.bf16.msra.mxu0 %v909
  %1204 = vmatpush.bf16.msra.mxu0 %v908
  %1205 = vmatpush.bf16.msra.mxu0 %v907
  %1206 = vmatmul.bf16.gmra.mxu0 %v312
  %v1207 = vpop.f32.mrf.mxu0
  %v1208 = vadd.f32 %v1195, %v1207
  %v1209 = vpop.f32.mrf.mxu0
  %1210 = vdwg.mxu0
  %1211 = vmatpush.bf16.msra.mxu0 %v922
  %1212 = vmatpush.bf16.msra.mxu0 %v921
  %1213 = vmatpush.bf16.msra.mxu0 %v920
  %1214 = vmatpush.bf16.msra.mxu0 %v919
  %1215 = vmatpush.bf16.msra.mxu0 %v918
  %1216 = vmatpush.bf16.msra.mxu0 %v917
  %1217 = vmatpush.bf16.msra.mxu0 %v916
  %1218 = vmatpush.bf16.msra.mxu0 %v915
  %1219 = vmatmul.bf16.gmra.mxu0 %v315
  %v1220 = vpop.f32.mrf.mxu0
  %v1221 = vadd.f32 %v1208, %v1220
  %v1222 = vpop.f32.mrf.mxu0
  %1223 = vdwg.mxu0
  %1224 = vmatpush.bf16.msra.mxu0 %v930
  %1225 = vmatpush.bf16.msra.mxu0 %v929
  %1226 = vmatpush.bf16.msra.mxu0 %v928
  %1227 = vmatpush.bf16.msra.mxu0 %v927
  %1228 = vmatpush.bf16.msra.mxu0 %v926
  %1229 = vmatpush.bf16.msra.mxu0 %v925
  %1230 = vmatpush.bf16.msra.mxu0 %v924
  %1231 = vmatpush.bf16.msra.mxu0 %v923
  %1232 = vmatmul.bf16.gmra.mxu0 %v316
  %v1233 = vpop.f32.mrf.mxu0
  %v1234 = vadd.f32 %v1221, %v1233
  %v1235 = vpop.f32.mrf.mxu0
  %1236 = vdwg.mxu0
  %1237 = vmatpush.bf16.msra.mxu0 %v938
  %1238 = vmatpush.bf16.msra.mxu0 %v937
  %1239 = vmatpush.bf16.msra.mxu0 %v936
  %1240 = vmatpush.bf16.msra.mxu0 %v935
  %1241 = vmatpush.bf16.msra.mxu0 %v934
  %1242 = vmatpush.bf16.msra.mxu0 %v933
  %1243 = vmatpush.bf16.msra.mxu0 %v932
  %1244 = vmatpush.bf16.msra.mxu0 %v931
  %1245 = vmatmul.bf16.gmra.mxu0 %v317
  %v1246 = vpop.f32.mrf.mxu0
  %v1247 = vadd.f32 %v1234, %v1246
  %v1248 = vpop.f32.mrf.mxu0
  %1249 = vdwg.mxu0
  %1250 = vmatpush.bf16.msra.mxu0 %v946
  %1251 = vmatpush.bf16.msra.mxu0 %v945
  %1252 = vmatpush.bf16.msra.mxu0 %v944
  %1253 = vmatpush.bf16.msra.mxu0 %v943
  %1254 = vmatpush.bf16.msra.mxu0 %v942
  %1255 = vmatpush.bf16.msra.mxu0 %v941
  %1256 = vmatpush.bf16.msra.mxu0 %v940
  %1257 = vmatpush.bf16.msra.mxu0 %v939
  %1258 = vmatmul.bf16.gmra.mxu0 %v318
  %v1259 = vpop.f32.mrf.mxu0
  %v1260 = vadd.f32 %v1247, %v1259
  %v1261 = vpop.f32.mrf.mxu0
  %1262 = vdwg.mxu0
  %1263 = vmatpush.bf16.msra.mxu0 %v954
  %1264 = vmatpush.bf16.msra.mxu0 %v953
  %1265 = vmatpush.bf16.msra.mxu0 %v952
  %1266 = vmatpush.bf16.msra.mxu0 %v951
  %1267 = vmatpush.bf16.msra.mxu0 %v950
  %1268 = vmatpush.bf16.msra.mxu0 %v949
  %1269 = vmatpush.bf16.msra.mxu0 %v948
  %1270 = vmatpush.bf16.msra.mxu0 %v947
  %1271 = vmatmul.bf16.gmra.mxu0 %v319
  %v1272 = vpop.f32.mrf.mxu0
  %v1273 = vadd.f32 %v1260, %v1272
  %v1274 = vpop.f32.mrf.mxu0
  %1275 = vdwg.mxu0
  %1276 = vmatpush.bf16.msra.mxu0 %v962
  %1277 = vmatpush.bf16.msra.mxu0 %v961
  %1278 = vmatpush.bf16.msra.mxu0 %v960
  %1279 = vmatpush.bf16.msra.mxu0 %v959
  %1280 = vmatpush.bf16.msra.mxu0 %v958
  %1281 = vmatpush.bf16.msra.mxu0 %v957
  %1282 = vmatpush.bf16.msra.mxu0 %v956
  %1283 = vmatpush.bf16.msra.mxu0 %v955
  %1284 = vmatmul.bf16.gmra.mxu0 %v320
  %v1285 = vpop.f32.mrf.mxu0
  %v1286 = vadd.f32 %v1273, %v1285
  %v1287 = vpop.f32.mrf.mxu0
  %1288 = vdwg.mxu0
  %1289 = vmatpush.bf16.msra.mxu0 %v970
  %1290 = vmatpush.bf16.msra.mxu0 %v969
  %1291 = vmatpush.bf16.msra.mxu0 %v968
  %1292 = vmatpush.bf16.msra.mxu0 %v967
  %1293 = vmatpush.bf16.msra.mxu0 %v966
  %1294 = vmatpush.bf16.msra.mxu0 %v965
  %1295 = vmatpush.bf16.msra.mxu0 %v964
  %1296 = vmatpush.bf16.msra.mxu0 %v963
  %1297 = vmatmul.bf16.gmra.mxu0 %v321
  %v1298 = vpop.f32.mrf.mxu0
  %v1299 = vadd.f32 %v1286, %v1298
  %v1300 = vpop.f32.mrf.mxu0
  %1301 = vdwg.mxu0
  %1302 = vmatpush.bf16.msra.mxu0 %v978
  %1303 = vmatpush.bf16.msra.mxu0 %v977
  %1304 = vmatpush.bf16.msra.mxu0 %v976
  %1305 = vmatpush.bf16.msra.mxu0 %v975
  %1306 = vmatpush.bf16.msra.mxu0 %v974
  %1307 = vmatpush.bf16.msra.mxu0 %v973
  %1308 = vmatpush.bf16.msra.mxu0 %v972
  %1309 = vmatpush.bf16.msra.mxu0 %v971
  %1310 = vmatmul.bf16.gmra.mxu0 %v322
  %v1311 = vpop.f32.mrf.mxu0
  %v1312 = vadd.f32 %v1299, %v1311
  %v1313 = vpop.f32.mrf.mxu0
  %1314 = vdwg.mxu0
  %v1315 = vld [vmem:[%s0] sm:$0xff]
  %v1316 = vld [vmem:[%s0 + $0x8] sm:$0xff]
  %v1317 = vld [vmem:[%s4] sm:$0xff]
  %v1318 = vld [vmem:[%s4 + $0x8] sm:$0xff]
  %v1319 = vld [vmem:[%s4 + $0x10] sm:$0xff]
  %v1320 = vld [vmem:[%s4 + $0x18] sm:$0xff]
  %v1321 = vld [vmem:[%s4 + $0x20] sm:$0xff]
  %v1322 = vld [vmem:[%s4 + $0x28] sm:$0xff]
  %v1323 = vld [vmem:[%s4 + $0x30] sm:$0xff]
  %v1324 = vld [vmem:[%s4 + $0x38] sm:$0xff]
  %v1325 = vld [vmem:[%s5] sm:$0x1]
  %v1327 = vperm.slane %v1325, 0
  %vm1329 = vcmask 523264
  %v1331 = vsel %vm1329, %v1315, 0
  %v1334 = vsel %vm1329, %v1316, 0
  %1336 = vmatpush.msra.mxu0 0.0
  %1337 = vmatpush.msra.mxu0 0.0
  %1338 = vmatpush.msra.mxu0 0.0
  %1339 = vmatpush.msra.mxu0 0.0
  %1340 = vmatpush.msra.mxu0 0.0
  %1341 = vmatpush.msra.mxu0 0.0
  %1342 = vmatpush.msra.mxu0 0.0
  %1343 = vmatpush.msra.mxu0 0.0
  %1344 = vmatpush.msra.mxu0 %v1324
  %1345 = vmatpush.msra.mxu0 %v1323
  %1346 = vmatpush.msra.mxu0 %v1322
  %1347 = vmatpush.msra.mxu0 %v1321
  %1348 = vmatpush.msra.mxu0 %v1320
  %1349 = vmatpush.msra.mxu0 %v1319
  %1350 = vmatpush.msra.mxu0 %v1318
  %1351 = vmatpush.msra.mxu0 %v1317
  %1352 = vmatmul.f32.gmra.mxu0 %v1331
  %v1353 = vpop.f32.mrf.mxu0
  %v1354 = vadd.f32 %v1327, %v1353
  %1355 = vmatmul.f32.gmra.mxu0 %v1334
  %v1356 = vpop.f32.mrf.mxu0
  %v1357 = vadd.f32 %v1327, %v1356
  %1358 = vdwg.mxu0
  %v1359 = vld [vmem:[%s6] sm:$0xff]
  %v1360 = vld [vmem:[%s6 + $0x8] sm:$0xff]
  %v1361 = vld [vmem:[%s7] sm:$0xff]
  %v1362 = vld [vmem:[%s7 + $0x8] sm:$0xff]
  %vm1363 = vcmask 130048
  %v1365 = vsel %vm1363, %v1312, 0
  %1367 = vmatpush.msra.mxu0 0.0
  %1368 = vmatpush.msra.mxu0 0.0
  %1369 = vmatpush.msra.mxu0 0.0
  %1370 = vmatpush.msra.mxu0 0.0
  %1371 = vmatpush.msra.mxu0 0.0
  %1372 = vmatpush.msra.mxu0 0.0
  %1373 = vmatpush.msra.mxu0 0.0
  %1374 = vmatpush.msra.mxu0 0.0
  %1375 = vmatpush.msra.mxu0 0.0
  %1376 = vmatpush.msra.mxu0 0.0
  %1377 = vmatpush.msra.mxu0 0.0
  %1378 = vmatpush.msra.mxu0 0.0
  %1379 = vmatpush.msra.mxu0 0.0
  %1380 = vmatpush.msra.mxu0 0.0
  %1381 = vmatpush.msra.mxu0 %v1360
  %1382 = vmatpush.msra.mxu0 %v1359
  %1383 = vmatmul.f32.gmra.mxu0 %v1365
  %v1384 = vpop.f32.mrf.mxu0
  %v1385 = vadd.f32 0.0, %v1384
  %1386 = vdwg.mxu0
  %v1387 = vadd.f32 %v1354, %v1385
  %v1388 = vxor.u32 %v1387, 2147483648
  %v1389 = vmul.f32 %v1388, 1.442695
  %v1390 = vpow.pop %v1389
  %v1391 = vadd.f32 %v1390, 1.0
  %v1392 = vrcp.pop %v1391
  %v1393 = vmul.f32 %v1391, %v1392
  %v1394 = vsub.f32 1.0, %v1393
  %v1395 = vmul.f32 %v1392, %v1394
  %v1396 = vadd.f32 %v1392, %v1395
  %vm1397 = vweird.f32 %v1391
  %vm1398 = vweird.f32 %v1392
  %vm1399 = vmor %vm1397, %vm1398
  %v1400 = vsel %vm1399, %v1392, %v1396
  %v1401 = vand.u32 2147483647, %v1391
  %vm1402 = vcmp.eq.f32.partialorder %v1401, 8.507059e+37
  %v1403 = vand.u32 %v1391, 2147483648
  %v1404 = vor.u32 1.1754944e-38, %v1403
  %v1405 = vsel %vm1402, %v1404, %v1400
  %v1406 = vmul.f32 1.0, %v1405
  %v1407 = vtanh.pop %v1387
  %v1408 = vmul.f32 %v1406, 0.0
  %1410 = vrot.lane.b32.xlu0 %v1407, 96
  %v1411 = vpop.permute.xlu0 %1410
  %v1413 = vmul.f32 %v1406, %v1411
  %1415 = vrot.lane.b32.xlu0 %v1413, 16
  %v1416 = vpop.permute.xlu0 %1415
  %v1418 = vadd.f32 %v1408, %v1416
  %v1419 = vtanh.pop %v1418
  %1421 = vrot.lane.b32.xlu0 %v1419, 32
  %v1422 = vpop.permute.xlu0 %1421
  %v1424 = vmul.f32 %v1406, %v1422
  %1425 = vrot.lane.b32.xlu0 %v1312, 112
  %v1426 = vpop.permute.xlu0 %1425
  %v1427 = vsel %vm1363, %v1426, 0
  %1429 = vmatpush.msra.mxu0 0.0
  %1430 = vmatpush.msra.mxu0 0.0
  %1431 = vmatpush.msra.mxu0 0.0
  %1432 = vmatpush.msra.mxu0 0.0
  %1433 = vmatpush.msra.mxu0 0.0
  %1434 = vmatpush.msra.mxu0 0.0
  %1435 = vmatpush.msra.mxu0 0.0
  %1436 = vmatpush.msra.mxu0 0.0
  %1437 = vmatpush.msra.mxu0 0.0
  %1438 = vmatpush.msra.mxu0 0.0
  %1439 = vmatpush.msra.mxu0 0.0
  %1440 = vmatpush.msra.mxu0 0.0
  %1441 = vmatpush.msra.mxu0 0.0
  %1442 = vmatpush.msra.mxu0 0.0
  %1443 = vmatpush.msra.mxu0 %v1362
  %1444 = vmatpush.msra.mxu0 %v1361
  %1445 = vmatmul.f32.gmra.mxu0 %v1427
  %v1446 = vpop.f32.mrf.mxu0
  %v1447 = vadd.f32 0.0, %v1446
  %1448 = vdwg.mxu0
  %v1450 = vrot.slane %v1447, 2
  %1451 = vrot.lane.b32.xlu0 %v1450, 64
  %v1452 = vpop.permute.xlu0 %1451
  %v1454 = vadd.f32 %v1357, %v1452
  %v1455 = vxor.u32 %v1454, 2147483648
  %v1456 = vmul.f32 %v1455, 1.442695
  %v1457 = vpow.pop %v1456
  %v1458 = vadd.f32 %v1457, 1.0
  %v1459 = vrcp.pop %v1458
  %v1460 = vmul.f32 %v1458, %v1459
  %v1461 = vsub.f32 1.0, %v1460
  %v1462 = vmul.f32 %v1459, %v1461
  %v1463 = vadd.f32 %v1459, %v1462
  %vm1464 = vweird.f32 %v1458
  %vm1465 = vweird.f32 %v1459
  %vm1466 = vmor %vm1464, %vm1465
  %v1467 = vsel %vm1466, %v1459, %v1463
  %v1468 = vand.u32 2147483647, %v1458
  %vm1469 = vcmp.eq.f32.partialorder %v1468, 8.507059e+37
  %v1470 = vand.u32 %v1458, 2147483648
  %v1471 = vor.u32 1.1754944e-38, %v1470
  %v1472 = vsel %vm1469, %v1471, %v1467
  %v1473 = vmul.f32 1.0, %v1472
  %v1474 = vtanh.pop %v1454
  %v1475 = vmul.f32 %v1473, 0.0
  %1477 = vrot.lane.b32.xlu0 %v1474, 96
  %v1478 = vpop.permute.xlu0 %1477
  %v1480 = vmul.f32 %v1473, %v1478
  %1482 = vrot.lane.b32.xlu0 %v1480, 16
  %v1483 = vpop.permute.xlu0 %1482
  %v1485 = vadd.f32 %v1475, %v1483
  %v1486 = vtanh.pop %v1485
  %1488 = vrot.lane.b32.xlu0 %v1486, 32
  %v1489 = vpop.permute.xlu0 %1488
  %v1491 = vmul.f32 %v1473, %v1489
  %1493 = vrot.lane.b32.xlu0 %v1424, 80
  %v1494 = vpop.permute.xlu0 %1493
  %vm1496 = vcmask 123904
  %1497 = vst.msk [vmem:[#allocation2] sm:$0x3] %vm1496, %v1494
  %1499 = vrot.lane.b32.xlu0 %v1491, 32
  %v1500 = vpop.permute.xlu0 %1499
  %vm1502 = vcmask 261254
  %1503 = vst.msk [vmem:[#allocation2 + $0x8] sm:$0xc0] %vm1502, %v1500
  %v1504 = vsel %vm1363, %v1494, 0
  %1506 = vmatpush.msra.mxu0 0.0
  %1507 = vmatpush.msra.mxu0 0.0
  %1508 = vmatpush.msra.mxu0 0.0
  %1509 = vmatpush.msra.mxu0 0.0
  %1510 = vmatpush.msra.mxu0 0.0
  %1511 = vmatpush.msra.mxu0 0.0
  %1512 = vmatpush.msra.mxu0 0.0
  %1513 = vmatpush.msra.mxu0 0.0
  %1514 = vmatpush.msra.mxu0 0.0
  %1515 = vmatpush.msra.mxu0 0.0
  %1516 = vmatpush.msra.mxu0 0.0
  %1517 = vmatpush.msra.mxu0 0.0
  %1518 = vmatpush.msra.mxu0 0.0
  %1519 = vmatpush.msra.mxu0 0.0
  %1520 = vmatpush.msra.mxu0 %v1360
  %1521 = vmatpush.msra.mxu0 %v1359
  %1522 = vmatmul.f32.gmra.mxu0 %v1504
  %v1523 = vpop.f32.mrf.mxu0
  %v1524 = vadd.f32 0.0, %v1523
  %1525 = vdwg.mxu0
  %v1527 = vrot.slane %v1524, 6
  %v1529 = vadd.f32 %v1354, %v1527
  %v1530 = vxor.u32 %v1529, 2147483648
  %v1531 = vmul.f32 %v1530, 1.442695
  %v1532 = vpow.pop %v1531
  %v1533 = vadd.f32 %v1532, 1.0
  %v1534 = vrcp.pop %v1533
  %v1535 = vmul.f32 %v1533, %v1534
  %v1536 = vsub.f32 1.0, %v1535
  %v1537 = vmul.f32 %v1534, %v1536
  %v1538 = vadd.f32 %v1534, %v1537
  %vm1539 = vweird.f32 %v1533
  %vm1540 = vweird.f32 %v1534
  %vm1541 = vmor %vm1539, %vm1540
  %v1542 = vsel %vm1541, %v1534, %v1538
  %v1543 = vand.u32 2147483647, %v1533
  %vm1544 = vcmp.eq.f32.partialorder %v1543, 8.507059e+37
  %v1545 = vand.u32 %v1533, 2147483648
  %v1546 = vor.u32 1.1754944e-38, %v1545
  %v1547 = vsel %vm1544, %v1546, %v1542
  %v1548 = vmul.f32 1.0, %v1547
  %v1549 = vtanh.pop %v1529
  %v1551 = vrot.slane %v1418, 6
  %v1553 = vmul.f32 %v1548, %v1551
  %1555 = vrot.lane.b32.xlu0 %v1549, 96
  %v1556 = vpop.permute.xlu0 %1555
  %v1558 = vmul.f32 %v1548, %v1556
  %1560 = vrot.lane.b32.xlu0 %v1558, 16
  %v1561 = vpop.permute.xlu0 %1560
  %v1563 = vadd.f32 %v1553, %v1561
  %v1564 = vtanh.pop %v1563
  %1566 = vrot.lane.b32.xlu0 %v1564, 32
  %v1567 = vpop.permute.xlu0 %1566
  %v1569 = vmul.f32 %v1548, %v1567
  %v1570 = vrot.slane %v1491, 6
  %1571 = vrot.lane.b32.xlu0 %v1570, 16
  %v1572 = vpop.permute.xlu0 %1571
  %v1573 = vsel %vm1363, %v1572, 0
  %1575 = vmatpush.msra.mxu0 0.0
  %1576 = vmatpush.msra.mxu0 0.0
  %1577 = vmatpush.msra.mxu0 0.0
  %1578 = vmatpush.msra.mxu0 0.0
  %1579 = vmatpush.msra.mxu0 0.0
  %1580 = vmatpush.msra.mxu0 0.0
  %1581 = vmatpush.msra.mxu0 0.0
  %1582 = vmatpush.msra.mxu0 0.0
  %1583 = vmatpush.msra.mxu0 0.0
  %1584 = vmatpush.msra.mxu0 0.0
  %1585 = vmatpush.msra.mxu0 0.0
  %1586 = vmatpush.msra.mxu0 0.0
  %1587 = vmatpush.msra.mxu0 0.0
  %1588 = vmatpush.msra.mxu0 0.0
  %1589 = vmatpush.msra.mxu0 %v1362
  %1590 = vmatpush.msra.mxu0 %v1361
  %1591 = vmatmul.f32.gmra.mxu0 %v1573
  %v1592 = vpop.f32.mrf.mxu0
  %v1593 = vadd.f32 0.0, %v1592
  %1594 = vdwg.mxu0
  %v1596 = vrot.slane %v1593, 4
  %1597 = vrot.lane.b32.xlu0 %v1596, 64
  %v1598 = vpop.permute.xlu0 %1597
  %v1600 = vadd.f32 %v1357, %v1598
  %v1601 = vxor.u32 %v1600, 2147483648
  %v1602 = vmul.f32 %v1601, 1.442695
  %v1603 = vpow.pop %v1602
  %v1604 = vadd.f32 %v1603, 1.0
  %v1605 = vrcp.pop %v1604
  %v1606 = vmul.f32 %v1604, %v1605
  %v1607 = vsub.f32 1.0, %v1606
  %v1608 = vmul.f32 %v1605, %v1607
  %v1609 = vadd.f32 %v1605, %v1608
  %vm1610 = vweird.f32 %v1604
  %vm1611 = vweird.f32 %v1605
  %vm1612 = vmor %vm1610, %vm1611
  %v1613 = vsel %vm1612, %v1605, %v1609
  %v1614 = vand.u32 2147483647, %v1604
  %vm1615 = vcmp.eq.f32.partialorder %v1614, 8.507059e+37
  %v1616 = vand.u32 %v1604, 2147483648
  %v1617 = vor.u32 1.1754944e-38, %v1616
  %v1618 = vsel %vm1615, %v1617, %v1613
  %v1619 = vmul.f32 1.0, %v1618
  %v1620 = vtanh.pop %v1600
  %v1622 = vrot.slane %v1485, 2
  %v1624 = vmul.f32 %v1619, %v1622
  %1626 = vrot.lane.b32.xlu0 %v1620, 96
  %v1627 = vpop.permute.xlu0 %1626
  %v1629 = vmul.f32 %v1619, %v1627
  %1631 = vrot.lane.b32.xlu0 %v1629, 16
  %v1632 = vpop.permute.xlu0 %1631
  %v1634 = vadd.f32 %v1624, %v1632
  %v1635 = vtanh.pop %v1634
  %1637 = vrot.lane.b32.xlu0 %v1635, 32
  %v1638 = vpop.permute.xlu0 %1637
  %v1640 = vmul.f32 %v1619, %v1638
  %1642 = vrot.lane.b32.xlu0 %v1569, 80
  %v1643 = vpop.permute.xlu0 %1642
  %vm1645 = vcmask 125954
  %1646 = vst.msk [vmem:[#allocation2] sm:$0xc] %vm1645, %v1643
  %1648 = vrot.lane.b32.xlu0 %v1640, 32
  %v1649 = vpop.permute.xlu0 %1648
  %vm1651 = vcmask 259204
  %1652 = vst.msk [vmem:[#allocation2 + $0x8] sm:$0x30] %vm1651, %v1649
  %v1653 = vrot.slane %v1569, 2
  %1654 = vrot.lane.b32.xlu0 %v1653, 80
  %v1655 = vpop.permute.xlu0 %1654
  %v1656 = vsel %vm1363, %v1655, 0
  %1658 = vmatpush.msra.mxu0 0.0
  %1659 = vmatpush.msra.mxu0 0.0
  %1660 = vmatpush.msra.mxu0 0.0
  %1661 = vmatpush.msra.mxu0 0.0
  %1662 = vmatpush.msra.mxu0 0.0
  %1663 = vmatpush.msra.mxu0 0.0
  %1664 = vmatpush.msra.mxu0 0.0
  %1665 = vmatpush.msra.mxu0 0.0
  %1666 = vmatpush.msra.mxu0 0.0
  %1667 = vmatpush.msra.mxu0 0.0
  %1668 = vmatpush.msra.mxu0 0.0
  %1669 = vmatpush.msra.mxu0 0.0
  %1670 = vmatpush.msra.mxu0 0.0
  %1671 = vmatpush.msra.mxu0 0.0
  %1672 = vmatpush.msra.mxu0 %v1360
  %1673 = vmatpush.msra.mxu0 %v1359
  %1674 = vmatmul.f32.gmra.mxu0 %v1656
  %v1675 = vpop.f32.mrf.mxu0
  %v1676 = vadd.f32 0.0, %v1675
  %1677 = vdwg.mxu0
  %v1679 = vrot.slane %v1676, 4
  %v1681 = vadd.f32 %v1354, %v1679
  %v1682 = vxor.u32 %v1681, 2147483648
  %v1683 = vmul.f32 %v1682, 1.442695
  %v1684 = vpow.pop %v1683
  %v1685 = vadd.f32 %v1684, 1.0
  %v1686 = vrcp.pop %v1685
  %v1687 = vmul.f32 %v1685, %v1686
  %v1688 = vsub.f32 1.0, %v1687
  %v1689 = vmul.f32 %v1686, %v1688
  %v1690 = vadd.f32 %v1686, %v1689
  %vm1691 = vweird.f32 %v1685
  %vm1692 = vweird.f32 %v1686
  %vm1693 = vmor %vm1691, %vm1692
  %v1694 = vsel %vm1693, %v1686, %v1690
  %v1695 = vand.u32 2147483647, %v1685
  %vm1696 = vcmp.eq.f32.partialorder %v1695, 8.507059e+37
  %v1697 = vand.u32 %v1685, 2147483648
  %v1698 = vor.u32 1.1754944e-38, %v1697
  %v1699 = vsel %vm1696, %v1698, %v1694
  %v1700 = vmul.f32 1.0, %v1699
  %v1701 = vtanh.pop %v1681
  %v1703 = vrot.slane %v1563, 6
  %v1705 = vmul.f32 %v1700, %v1703
  %1707 = vrot.lane.b32.xlu0 %v1701, 96
  %v1708 = vpop.permute.xlu0 %1707
  %v1710 = vmul.f32 %v1700, %v1708
  %1712 = vrot.lane.b32.xlu0 %v1710, 16
  %v1713 = vpop.permute.xlu0 %1712
  %v1715 = vadd.f32 %v1705, %v1713
  %v1716 = vtanh.pop %v1715
  %1718 = vrot.lane.b32.xlu0 %v1716, 32
  %v1719 = vpop.permute.xlu0 %1718
  %v1721 = vmul.f32 %v1700, %v1719
  %v1722 = vrot.slane %v1640, 4
  %1723 = vrot.lane.b32.xlu0 %v1722, 16
  %v1724 = vpop.permute.xlu0 %1723
  %v1725 = vsel %vm1363, %v1724, 0
  %1727 = vmatpush.msra.mxu0 0.0
  %1728 = vmatpush.msra.mxu0 0.0
  %1729 = vmatpush.msra.mxu0 0.0
  %1730 = vmatpush.msra.mxu0 0.0
  %1731 = vmatpush.msra.mxu0 0.0
  %1732 = vmatpush.msra.mxu0 0.0
  %1733 = vmatpush.msra.mxu0 0.0
  %1734 = vmatpush.msra.mxu0 0.0
  %1735 = vmatpush.msra.mxu0 0.0
  %1736 = vmatpush.msra.mxu0 0.0
  %1737 = vmatpush.msra.mxu0 0.0
  %1738 = vmatpush.msra.mxu0 0.0
  %1739 = vmatpush.msra.mxu0 0.0
  %1740 = vmatpush.msra.mxu0 0.0
  %1741 = vmatpush.msra.mxu0 %v1362
  %1742 = vmatpush.msra.mxu0 %v1361
  %1743 = vmatmul.f32.gmra.mxu0 %v1725
  %v1744 = vpop.f32.mrf.mxu0
  %v1745 = vadd.f32 0.0, %v1744
  %1746 = vdwg.mxu0
  %v1748 = vrot.slane %v1745, 6
  %1749 = vrot.lane.b32.xlu0 %v1748, 64
  %v1750 = vpop.permute.xlu0 %1749
  %v1752 = vadd.f32 %v1357, %v1750
  %v1753 = vxor.u32 %v1752, 2147483648
  %v1754 = vmul.f32 %v1753, 1.442695
  %v1755 = vpow.pop %v1754
  %v1756 = vadd.f32 %v1755, 1.0
  %v1757 = vrcp.pop %v1756
  %v1758 = vmul.f32 %v1756, %v1757
  %v1759 = vsub.f32 1.0, %v1758
  %v1760 = vmul.f32 %v1757, %v1759
  %v1761 = vadd.f32 %v1757, %v1760
  %vm1762 = vweird.f32 %v1756
  %vm1763 = vweird.f32 %v1757
  %vm1764 = vmor %vm1762, %vm1763
  %v1765 = vsel %vm1764, %v1757, %v1761
  %v1766 = vand.u32 2147483647, %v1756
  %vm1767 = vcmp.eq.f32.partialorder %v1766, 8.507059e+37
  %v1768 = vand.u32 %v1756, 2147483648
  %v1769 = vor.u32 1.1754944e-38, %v1768
  %v1770 = vsel %vm1767, %v1769, %v1765
  %v1771 = vmul.f32 1.0, %v1770
  %v1772 = vtanh.pop %v1752
  %v1774 = vrot.slane %v1634, 2
  %v1776 = vmul.f32 %v1771, %v1774
  %1778 = vrot.lane.b32.xlu0 %v1772, 96
  %v1779 = vpop.permute.xlu0 %1778
  %v1781 = vmul.f32 %v1771, %v1779
  %1783 = vrot.lane.b32.xlu0 %v1781, 16
  %v1784 = vpop.permute.xlu0 %1783
  %v1786 = vadd.f32 %v1776, %v1784
  %v1787 = vtanh.pop %v1786
  %1789 = vrot.lane.b32.xlu0 %v1787, 32
  %v1790 = vpop.permute.xlu0 %1789
  %v1792 = vmul.f32 %v1771, %v1790
  %1794 = vrot.lane.b32.xlu0 %v1721, 80
  %v1795 = vpop.permute.xlu0 %1794
  %vm1797 = vcmask 128004
  %1798 = vst.msk [vmem:[#allocation2] sm:$0x30] %vm1797, %v1795
  %1800 = vrot.lane.b32.xlu0 %v1792, 32
  %v1801 = vpop.permute.xlu0 %1800
  %vm1803 = vcmask 257154
  %1804 = vst.msk [vmem:[#allocation2 + $0x8] sm:$0xc] %vm1803, %v1801
  %v1805 = vrot.slane %v1721, 4
  %1806 = vrot.lane.b32.xlu0 %v1805, 80
  %v1807 = vpop.permute.xlu0 %1806
  %v1808 = vsel %vm1363, %v1807, 0
  %1810 = vmatpush.msra.mxu0 0.0
  %1811 = vmatpush.msra.mxu0 0.0
  %1812 = vmatpush.msra.mxu0 0.0
  %1813 = vmatpush.msra.mxu0 0.0
  %1814 = vmatpush.msra.mxu0 0.0
  %1815 = vmatpush.msra.mxu0 0.0
  %1816 = vmatpush.msra.mxu0 0.0
  %1817 = vmatpush.msra.mxu0 0.0
  %1818 = vmatpush.msra.mxu0 0.0
  %1819 = vmatpush.msra.mxu0 0.0
  %1820 = vmatpush.msra.mxu0 0.0
  %1821 = vmatpush.msra.mxu0 0.0
  %1822 = vmatpush.msra.mxu0 0.0
  %1823 = vmatpush.msra.mxu0 0.0
  %1824 = vmatpush.msra.mxu0 %v1360
  %1825 = vmatpush.msra.mxu0 %v1359
  %1826 = vmatmul.f32.gmra.mxu0 %v1808
  %v1827 = vpop.f32.mrf.mxu0
  %v1828 = vadd.f32 0.0, %v1827
  %1829 = vdwg.mxu0
  %v1831 = vrot.slane %v1828, 2
  %v1833 = vadd.f32 %v1354, %v1831
  %v1834 = vxor.u32 %v1833, 2147483648
  %v1835 = vmul.f32 %v1834, 1.442695
  %v1836 = vpow.pop %v1835
  %v1837 = vadd.f32 %v1836, 1.0
  %v1838 = vrcp.pop %v1837
  %v1839 = vmul.f32 %v1837, %v1838
  %v1840 = vsub.f32 1.0, %v1839
  %v1841 = vmul.f32 %v1838, %v1840
  %v1842 = vadd.f32 %v1838, %v1841
  %vm1843 = vweird.f32 %v1837
  %vm1844 = vweird.f32 %v1838
  %vm1845 = vmor %vm1843, %vm1844
  %v1846 = vsel %vm1845, %v1838, %v1842
  %v1847 = vand.u32 2147483647, %v1837
  %vm1848 = vcmp.eq.f32.partialorder %v1847, 8.507059e+37
  %v1849 = vand.u32 %v1837, 2147483648
  %v1850 = vor.u32 1.1754944e-38, %v1849
  %v1851 = vsel %vm1848, %v1850, %v1846
  %v1852 = vmul.f32 1.0, %v1851
  %v1853 = vtanh.pop %v1833
  %v1855 = vrot.slane %v1715, 6
  %v1857 = vmul.f32 %v1852, %v1855
  %1859 = vrot.lane.b32.xlu0 %v1853, 96
  %v1860 = vpop.permute.xlu0 %1859
  %v1862 = vmul.f32 %v1852, %v1860
  %1864 = vrot.lane.b32.xlu0 %v1862, 16
  %v1865 = vpop.permute.xlu0 %1864
  %v1867 = vadd.f32 %v1857, %v1865
  %v1868 = vtanh.pop %v1867
  %1870 = vrot.lane.b32.xlu0 %v1868, 32
  %v1871 = vpop.permute.xlu0 %1870
  %v1873 = vmul.f32 %v1852, %v1871
  %v1874 = vrot.slane %v1792, 2
  %1875 = vrot.lane.b32.xlu0 %v1874, 16
  %v1876 = vpop.permute.xlu0 %1875
  %v1877 = vsel %vm1363, %v1876, 0
  %1879 = vmatpush.msra.mxu0 0.0
  %1880 = vmatpush.msra.mxu0 0.0
  %1881 = vmatpush.msra.mxu0 0.0
  %1882 = vmatpush.msra.mxu0 0.0
  %1883 = vmatpush.msra.mxu0 0.0
  %1884 = vmatpush.msra.mxu0 0.0
  %1885 = vmatpush.msra.mxu0 0.0
  %1886 = vmatpush.msra.mxu0 0.0
  %1887 = vmatpush.msra.mxu0 0.0
  %1888 = vmatpush.msra.mxu0 0.0
  %1889 = vmatpush.msra.mxu0 0.0
  %1890 = vmatpush.msra.mxu0 0.0
  %1891 = vmatpush.msra.mxu0 0.0
  %1892 = vmatpush.msra.mxu0 0.0
  %1893 = vmatpush.msra.mxu0 %v1362
  %1894 = vmatpush.msra.mxu0 %v1361
  %1895 = vmatmul.f32.gmra.mxu0 %v1877
  %v1896 = vpop.f32.mrf.mxu0
  %v1897 = vadd.f32 0.0, %v1896
  %1898 = vdwg.mxu0
  %1900 = vrot.lane.b32.xlu0 %v1897, 64
  %v1901 = vpop.permute.xlu0 %1900
  %v1903 = vadd.f32 %v1357, %v1901
  %v1904 = vxor.u32 %v1903, 2147483648
  %v1905 = vmul.f32 %v1904, 1.442695
  %v1906 = vpow.pop %v1905
  %v1907 = vadd.f32 %v1906, 1.0
  %v1908 = vrcp.pop %v1907
  %v1909 = vmul.f32 %v1907, %v1908
  %v1910 = vsub.f32 1.0, %v1909
  %v1911 = vmul.f32 %v1908, %v1910
  %v1912 = vadd.f32 %v1908, %v1911
  %vm1913 = vweird.f32 %v1907
  %vm1914 = vweird.f32 %v1908
  %vm1915 = vmor %vm1913, %vm1914
  %v1916 = vsel %vm1915, %v1908, %v1912
  %v1917 = vand.u32 2147483647, %v1907
  %vm1918 = vcmp.eq.f32.partialorder %v1917, 8.507059e+37
  %v1919 = vand.u32 %v1907, 2147483648
  %v1920 = vor.u32 1.1754944e-38, %v1919
  %v1921 = vsel %vm1918, %v1920, %v1916
  %v1922 = vmul.f32 1.0, %v1921
  %v1923 = vtanh.pop %v1903
  %v1925 = vrot.slane %v1786, 2
  %v1927 = vmul.f32 %v1922, %v1925
  %1929 = vrot.lane.b32.xlu0 %v1923, 96
  %v1930 = vpop.permute.xlu0 %1929
  %v1932 = vmul.f32 %v1922, %v1930
  %1934 = vrot.lane.b32.xlu0 %v1932, 16
  %v1935 = vpop.permute.xlu0 %1934
  %v1937 = vadd.f32 %v1927, %v1935
  %v1938 = vtanh.pop %v1937
  %1940 = vrot.lane.b32.xlu0 %v1938, 32
  %v1941 = vpop.permute.xlu0 %1940
  %v1943 = vmul.f32 %v1922, %v1941
  %1945 = vrot.lane.b32.xlu0 %v1873, 80
  %v1946 = vpop.permute.xlu0 %1945
  %vm1948 = vcmask 130054
  %1949 = vst.msk [vmem:[#allocation2] sm:$0xc0] %vm1948, %v1946
  %1951 = vrot.lane.b32.xlu0 %v1943, 32
  %v1952 = vpop.permute.xlu0 %1951
  %vm1954 = vcmask 255104
  %1955 = vst.msk [vmem:[#allocation2 + $0x8] sm:$0x3] %vm1954, %v1952
  %v1956 = vrot.slane %v1873, 6
  %1957 = vrot.lane.b32.xlu0 %v1956, 80
  %v1958 = vpop.permute.xlu0 %1957
  %v1959 = vsel %vm1363, %v1958, 0
  %1961 = vmatpush.msra.mxu0 0.0
  %1962 = vmatpush.msra.mxu0 0.0
  %1963 = vmatpush.msra.mxu0 0.0
  %1964 = vmatpush.msra.mxu0 0.0
  %1965 = vmatpush.msra.mxu0 0.0
  %1966 = vmatpush.msra.mxu0 0.0
  %1967 = vmatpush.msra.mxu0 0.0
  %1968 = vmatpush.msra.mxu0 0.0
  %1969 = vmatpush.msra.mxu0 0.0
  %1970 = vmatpush.msra.mxu0 0.0
  %1971 = vmatpush.msra.mxu0 0.0
  %1972 = vmatpush.msra.mxu0 0.0
  %1973 = vmatpush.msra.mxu0 0.0
  %1974 = vmatpush.msra.mxu0 0.0
  %1975 = vmatpush.msra.mxu0 %v1360
  %1976 = vmatpush.msra.mxu0 %v1359
  %1977 = vmatmul.f32.gmra.mxu0 %v1959
  %v1978 = vpop.f32.mrf.mxu0
  %v1979 = vadd.f32 0.0, %v1978
  %1980 = vdwg.mxu0
  %v1981 = vadd.f32 %v1357, %v1979
  %v1982 = vxor.u32 %v1981, 2147483648
  %v1983 = vmul.f32 %v1982, 1.442695
  %v1984 = vpow.pop %v1983
  %v1985 = vadd.f32 %v1984, 1.0
  %v1986 = vrcp.pop %v1985
  %v1987 = vmul.f32 %v1985, %v1986
  %v1988 = vsub.f32 1.0, %v1987
  %v1989 = vmul.f32 %v1986, %v1988
  %v1990 = vadd.f32 %v1986, %v1989
  %vm1991 = vweird.f32 %v1985
  %vm1992 = vweird.f32 %v1986
  %vm1993 = vmor %vm1991, %vm1992
  %v1994 = vsel %vm1993, %v1986, %v1990
  %v1995 = vand.u32 2147483647, %v1985
  %vm1996 = vcmp.eq.f32.partialorder %v1995, 8.507059e+37
  %v1997 = vand.u32 %v1985, 2147483648
  %v1998 = vor.u32 1.1754944e-38, %v1997
  %v1999 = vsel %vm1996, %v1998, %v1994
  %v2000 = vmul.f32 1.0, %v1999
  %v2001 = vtanh.pop %v1981
  %v2003 = vrot.slane %v1867, 6
  %v2005 = vmul.f32 %v2000, %v2003
  %2007 = vrot.lane.b32.xlu0 %v2001, 96
  %v2008 = vpop.permute.xlu0 %2007
  %v2010 = vmul.f32 %v2000, %v2008
  %2012 = vrot.lane.b32.xlu0 %v2010, 16
  %v2013 = vpop.permute.xlu0 %2012
  %v2015 = vadd.f32 %v2005, %v2013
  %v2016 = vtanh.pop %v2015
  %2018 = vrot.lane.b32.xlu0 %v2016, 32
  %v2019 = vpop.permute.xlu0 %2018
  %v2021 = vmul.f32 %v2000, %v2019
  %2022 = vrot.lane.b32.xlu0 %v1943, 16
  %v2023 = vpop.permute.xlu0 %2022
  %v2024 = vsel %vm1363, %v2023, 0
  %2026 = vmatpush.msra.mxu0 0.0
  %2027 = vmatpush.msra.mxu0 0.0
  %2028 = vmatpush.msra.mxu0 0.0
  %2029 = vmatpush.msra.mxu0 0.0
  %2030 = vmatpush.msra.mxu0 0.0
  %2031 = vmatpush.msra.mxu0 0.0
  %2032 = vmatpush.msra.mxu0 0.0
  %2033 = vmatpush.msra.mxu0 0.0
  %2034 = vmatpush.msra.mxu0 0.0
  %2035 = vmatpush.msra.mxu0 0.0
  %2036 = vmatpush.msra.mxu0 0.0
  %2037 = vmatpush.msra.mxu0 0.0
  %2038 = vmatpush.msra.mxu0 0.0
  %2039 = vmatpush.msra.mxu0 0.0
  %2040 = vmatpush.msra.mxu0 %v1362
  %2041 = vmatpush.msra.mxu0 %v1361
  %2042 = vmatmul.f32.gmra.mxu0 %v2024
  %v2043 = vpop.f32.mrf.mxu0
  %v2044 = vadd.f32 0.0, %v2043
  %2045 = vdwg.mxu0
  %v2047 = vrot.slane %v2044, 2
  %2048 = vrot.lane.b32.xlu0 %v2047, 64
  %v2049 = vpop.permute.xlu0 %2048
  %v2051 = vadd.f32 %v1354, %v2049
  %v2052 = vxor.u32 %v2051, 2147483648
  %v2053 = vmul.f32 %v2052, 1.442695
  %v2054 = vpow.pop %v2053
  %v2055 = vadd.f32 %v2054, 1.0
  %v2056 = vrcp.pop %v2055
  %v2057 = vmul.f32 %v2055, %v2056
  %v2058 = vsub.f32 1.0, %v2057
  %v2059 = vmul.f32 %v2056, %v2058
  %v2060 = vadd.f32 %v2056, %v2059
  %vm2061 = vweird.f32 %v2055
  %vm2062 = vweird.f32 %v2056
  %vm2063 = vmor %vm2061, %vm2062
  %v2064 = vsel %vm2063, %v2056, %v2060
  %v2065 = vand.u32 2147483647, %v2055
  %vm2066 = vcmp.eq.f32.partialorder %v2065, 8.507059e+37
  %v2067 = vand.u32 %v2055, 2147483648
  %v2068 = vor.u32 1.1754944e-38, %v2067
  %v2069 = vsel %vm2066, %v2068, %v2064
  %v2070 = vmul.f32 1.0, %v2069
  %v2071 = vtanh.pop %v2051
  %v2073 = vrot.slane %v1937, 2
  %v2075 = vmul.f32 %v2070, %v2073
  %2077 = vrot.lane.b32.xlu0 %v2071, 96
  %v2078 = vpop.permute.xlu0 %2077
  %v2080 = vmul.f32 %v2070, %v2078
  %2082 = vrot.lane.b32.xlu0 %v2080, 16
  %v2083 = vpop.permute.xlu0 %2082
  %v2085 = vadd.f32 %v2075, %v2083
  %v2086 = vtanh.pop %v2085
  %2088 = vrot.lane.b32.xlu0 %v2086, 32
  %v2089 = vpop.permute.xlu0 %2088
  %v2091 = vmul.f32 %v2070, %v2089
  %2093 = vrot.lane.b32.xlu0 %v2021, 80
  %v2094 = vpop.permute.xlu0 %2093
  %2096 = vst.msk [vmem:[#allocation2 + $0x8] sm:$0x3] %vm1496, %v2094
  %2098 = vrot.lane.b32.xlu0 %v2091, 32
  %v2099 = vpop.permute.xlu0 %2098
  %2101 = vst.msk [vmem:[#allocation2] sm:$0xc0] %vm1502, %v2099
  %v2102 = vsel %vm1363, %v2094, 0
  %2104 = vmatpush.msra.mxu0 0.0
  %2105 = vmatpush.msra.mxu0 0.0
  %2106 = vmatpush.msra.mxu0 0.0
  %2107 = vmatpush.msra.mxu0 0.0
  %2108 = vmatpush.msra.mxu0 0.0
  %2109 = vmatpush.msra.mxu0 0.0
  %2110 = vmatpush.msra.mxu0 0.0
  %2111 = vmatpush.msra.mxu0 0.0
  %2112 = vmatpush.msra.mxu0 0.0
  %2113 = vmatpush.msra.mxu0 0.0
  %2114 = vmatpush.msra.mxu0 0.0
  %2115 = vmatpush.msra.mxu0 0.0
  %2116 = vmatpush.msra.mxu0 0.0
  %2117 = vmatpush.msra.mxu0 0.0
  %2118 = vmatpush.msra.mxu0 %v1360
  %2119 = vmatpush.msra.mxu0 %v1359
  %2120 = vmatmul.f32.gmra.mxu0 %v2102
  %v2121 = vpop.f32.mrf.mxu0
  %v2122 = vadd.f32 0.0, %v2121
  %2123 = vdwg.mxu0
  %v2125 = vrot.slane %v2122, 6
  %v2127 = vadd.f32 %v1357, %v2125
  %v2128 = vxor.u32 %v2127, 2147483648
  %v2129 = vmul.f32 %v2128, 1.442695
  %v2130 = vpow.pop %v2129
  %v2131 = vadd.f32 %v2130, 1.0
  %v2132 = vrcp.pop %v2131
  %v2133 = vmul.f32 %v2131, %v2132
  %v2134 = vsub.f32 1.0, %v2133
  %v2135 = vmul.f32 %v2132, %v2134
  %v2136 = vadd.f32 %v2132, %v2135
  %vm2137 = vweird.f32 %v2131
  %vm2138 = vweird.f32 %v2132
  %vm2139 = vmor %vm2137, %vm2138
  %v2140 = vsel %vm2139, %v2132, %v2136
  %v2141 = vand.u32 2147483647, %v2131
  %vm2142 = vcmp.eq.f32.partialorder %v2141, 8.507059e+37
  %v2143 = vand.u32 %v2131, 2147483648
  %v2144 = vor.u32 1.1754944e-38, %v2143
  %v2145 = vsel %vm2142, %v2144, %v2140
  %v2146 = vmul.f32 1.0, %v2145
  %v2147 = vtanh.pop %v2127
  %v2149 = vrot.slane %v2015, 6
  %v2151 = vmul.f32 %v2146, %v2149
  %2153 = vrot.lane.b32.xlu0 %v2147, 96
  %v2154 = vpop.permute.xlu0 %2153
  %v2156 = vmul.f32 %v2146, %v2154
  %2158 = vrot.lane.b32.xlu0 %v2156, 16
  %v2159 = vpop.permute.xlu0 %2158
  %v2161 = vadd.f32 %v2151, %v2159
  %v2162 = vtanh.pop %v2161
  %2164 = vrot.lane.b32.xlu0 %v2162, 32
  %v2165 = vpop.permute.xlu0 %2164
  %v2167 = vmul.f32 %v2146, %v2165
  %v2168 = vrot.slane %v2091, 6
  %2169 = vrot.lane.b32.xlu0 %v2168, 16
  %v2170 = vpop.permute.xlu0 %2169
  %v2171 = vsel %vm1363, %v2170, 0
  %2173 = vmatpush.msra.mxu0 0.0
  %2174 = vmatpush.msra.mxu0 0.0
  %2175 = vmatpush.msra.mxu0 0.0
  %2176 = vmatpush.msra.mxu0 0.0
  %2177 = vmatpush.msra.mxu0 0.0
  %2178 = vmatpush.msra.mxu0 0.0
  %2179 = vmatpush.msra.mxu0 0.0
  %2180 = vmatpush.msra.mxu0 0.0
  %2181 = vmatpush.msra.mxu0 0.0
  %2182 = vmatpush.msra.mxu0 0.0
  %2183 = vmatpush.msra.mxu0 0.0
  %2184 = vmatpush.msra.mxu0 0.0
  %2185 = vmatpush.msra.mxu0 0.0
  %2186 = vmatpush.msra.mxu0 0.0
  %2187 = vmatpush.msra.mxu0 %v1362
  %2188 = vmatpush.msra.mxu0 %v1361
  %2189 = vmatmul.f32.gmra.mxu0 %v2171
  %v2190 = vpop.f32.mrf.mxu0
  %v2191 = vadd.f32 0.0, %v2190
  %2192 = vdwg.mxu0
  %v2194 = vrot.slane %v2191, 4
  %2195 = vrot.lane.b32.xlu0 %v2194, 64
  %v2196 = vpop.permute.xlu0 %2195
  %v2198 = vadd.f32 %v1354, %v2196
  %v2199 = vxor.u32 %v2198, 2147483648
  %v2200 = vmul.f32 %v2199, 1.442695
  %v2201 = vpow.pop %v2200
  %v2202 = vadd.f32 %v2201, 1.0
  %v2203 = vrcp.pop %v2202
  %v2204 = vmul.f32 %v2202, %v2203
  %v2205 = vsub.f32 1.0, %v2204
  %v2206 = vmul.f32 %v2203, %v2205
  %v2207 = vadd.f32 %v2203, %v2206
  %vm2208 = vweird.f32 %v2202
  %vm2209 = vweird.f32 %v2203
  %vm2210 = vmor %vm2208, %vm2209
  %v2211 = vsel %vm2210, %v2203, %v2207
  %v2212 = vand.u32 2147483647, %v2202
  %vm2213 = vcmp.eq.f32.partialorder %v2212, 8.507059e+37
  %v2214 = vand.u32 %v2202, 2147483648
  %v2215 = vor.u32 1.1754944e-38, %v2214
  %v2216 = vsel %vm2213, %v2215, %v2211
  %v2217 = vmul.f32 1.0, %v2216
  %v2218 = vtanh.pop %v2198
  %v2220 = vrot.slane %v2085, 2
  %v2222 = vmul.f32 %v2217, %v2220
  %2224 = vrot.lane.b32.xlu0 %v2218, 96
  %v2225 = vpop.permute.xlu0 %2224
  %v2227 = vmul.f32 %v2217, %v2225
  %2229 = vrot.lane.b32.xlu0 %v2227, 16
  %v2230 = vpop.permute.xlu0 %2229
  %v2232 = vadd.f32 %v2222, %v2230
  %v2233 = vtanh.pop %v2232
  %2235 = vrot.lane.b32.xlu0 %v2233, 32
  %v2236 = vpop.permute.xlu0 %2235
  %v2238 = vmul.f32 %v2217, %v2236
  %2240 = vrot.lane.b32.xlu0 %v2167, 80
  %v2241 = vpop.permute.xlu0 %2240
  %2243 = vst.msk [vmem:[#allocation2 + $0x8] sm:$0xc] %vm1645, %v2241
  %2245 = vrot.lane.b32.xlu0 %v2238, 32
  %v2246 = vpop.permute.xlu0 %2245
  %2248 = vst.msk [vmem:[#allocation2] sm:$0x30] %vm1651, %v2246
  %v2249 = vrot.slane %v2167, 2
  %2250 = vrot.lane.b32.xlu0 %v2249, 80
  %v2251 = vpop.permute.xlu0 %2250
  %v2252 = vsel %vm1363, %v2251, 0
  %2254 = vmatpush.msra.mxu0 0.0
  %2255 = vmatpush.msra.mxu0 0.0
  %2256 = vmatpush.msra.mxu0 0.0
  %2257 = vmatpush.msra.mxu0 0.0
  %2258 = vmatpush.msra.mxu0 0.0
  %2259 = vmatpush.msra.mxu0 0.0
  %2260 = vmatpush.msra.mxu0 0.0
  %2261 = vmatpush.msra.mxu0 0.0
  %2262 = vmatpush.msra.mxu0 0.0
  %2263 = vmatpush.msra.mxu0 0.0
  %2264 = vmatpush.msra.mxu0 0.0
  %2265 = vmatpush.msra.mxu0 0.0
  %2266 = vmatpush.msra.mxu0 0.0
  %2267 = vmatpush.msra.mxu0 0.0
  %2268 = vmatpush.msra.mxu0 %v1360
  %2269 = vmatpush.msra.mxu0 %v1359
  %2270 = vmatmul.f32.gmra.mxu0 %v2252
  %v2271 = vpop.f32.mrf.mxu0
  %v2272 = vadd.f32 0.0, %v2271
  %2273 = vdwg.mxu0
  %v2275 = vrot.slane %v2272, 4
  %v2277 = vadd.f32 %v1357, %v2275
  %v2278 = vxor.u32 %v2277, 2147483648
  %v2279 = vmul.f32 %v2278, 1.442695
  %v2280 = vpow.pop %v2279
  %v2281 = vadd.f32 %v2280, 1.0
  %v2282 = vrcp.pop %v2281
  %v2283 = vmul.f32 %v2281, %v2282
  %v2284 = vsub.f32 1.0, %v2283
  %v2285 = vmul.f32 %v2282, %v2284
  %v2286 = vadd.f32 %v2282, %v2285
  %vm2287 = vweird.f32 %v2281
  %vm2288 = vweird.f32 %v2282
  %vm2289 = vmor %vm2287, %vm2288
  %v2290 = vsel %vm2289, %v2282, %v2286
  %v2291 = vand.u32 2147483647, %v2281
  %vm2292 = vcmp.eq.f32.partialorder %v2291, 8.507059e+37
  %v2293 = vand.u32 %v2281, 2147483648
  %v2294 = vor.u32 1.1754944e-38, %v2293
  %v2295 = vsel %vm2292, %v2294, %v2290
  %v2296 = vmul.f32 1.0, %v2295
  %v2297 = vtanh.pop %v2277
  %v2299 = vrot.slane %v2161, 6
  %v2301 = vmul.f32 %v2296, %v2299
  %2303 = vrot.lane.b32.xlu0 %v2297, 96
  %v2304 = vpop.permute.xlu0 %2303
  %v2306 = vmul.f32 %v2296, %v2304
  %2308 = vrot.lane.b32.xlu0 %v2306, 16
  %v2309 = vpop.permute.xlu0 %2308
  %v2311 = vadd.f32 %v2301, %v2309
  %v2312 = vtanh.pop %v2311
  %2314 = vrot.lane.b32.xlu0 %v2312, 32
  %v2315 = vpop.permute.xlu0 %2314
  %v2317 = vmul.f32 %v2296, %v2315
  %v2318 = vrot.slane %v2238, 4
  %2319 = vrot.lane.b32.xlu0 %v2318, 16
  %v2320 = vpop.permute.xlu0 %2319
  %v2321 = vsel %vm1363, %v2320, 0
  %2323 = vmatpush.msra.mxu0 0.0
  %2324 = vmatpush.msra.mxu0 0.0
  %2325 = vmatpush.msra.mxu0 0.0
  %2326 = vmatpush.msra.mxu0 0.0
  %2327 = vmatpush.msra.mxu0 0.0
  %2328 = vmatpush.msra.mxu0 0.0
  %2329 = vmatpush.msra.mxu0 0.0
  %2330 = vmatpush.msra.mxu0 0.0
  %2331 = vmatpush.msra.mxu0 0.0
  %2332 = vmatpush.msra.mxu0 0.0
  %2333 = vmatpush.msra.mxu0 0.0
  %2334 = vmatpush.msra.mxu0 0.0
  %2335 = vmatpush.msra.mxu0 0.0
  %2336 = vmatpush.msra.mxu0 0.0
  %2337 = vmatpush.msra.mxu0 %v1362
  %2338 = vmatpush.msra.mxu0 %v1361
  %2339 = vmatmul.f32.gmra.mxu0 %v2321
  %v2340 = vpop.f32.mrf.mxu0
  %v2341 = vadd.f32 0.0, %v2340
  %2342 = vdwg.mxu0
  %v2344 = vrot.slane %v2341, 6
  %2345 = vrot.lane.b32.xlu0 %v2344, 64
  %v2346 = vpop.permute.xlu0 %2345
  %v2348 = vadd.f32 %v1354, %v2346
  %v2349 = vxor.u32 %v2348, 2147483648
  %v2350 = vmul.f32 %v2349, 1.442695
  %v2351 = vpow.pop %v2350
  %v2352 = vadd.f32 %v2351, 1.0
  %v2353 = vrcp.pop %v2352
  %v2354 = vmul.f32 %v2352, %v2353
  %v2355 = vsub.f32 1.0, %v2354
  %v2356 = vmul.f32 %v2353, %v2355
  %v2357 = vadd.f32 %v2353, %v2356
  %vm2358 = vweird.f32 %v2352
  %vm2359 = vweird.f32 %v2353
  %vm2360 = vmor %vm2358, %vm2359
  %v2361 = vsel %vm2360, %v2353, %v2357
  %v2362 = vand.u32 2147483647, %v2352
  %vm2363 = vcmp.eq.f32.partialorder %v2362, 8.507059e+37
  %v2364 = vand.u32 %v2352, 2147483648
  %v2365 = vor.u32 1.1754944e-38, %v2364
  %v2366 = vsel %vm2363, %v2365, %v2361
  %v2367 = vmul.f32 1.0, %v2366
  %v2368 = vtanh.pop %v2348
  %v2370 = vrot.slane %v2232, 2
  %v2372 = vmul.f32 %v2367, %v2370
  %2374 = vrot.lane.b32.xlu0 %v2368, 96
  %v2375 = vpop.permute.xlu0 %2374
  %v2377 = vmul.f32 %v2367, %v2375
  %2379 = vrot.lane.b32.xlu0 %v2377, 16
  %v2380 = vpop.permute.xlu0 %2379
  %v2382 = vadd.f32 %v2372, %v2380
  %v2383 = vtanh.pop %v2382
  %2385 = vrot.lane.b32.xlu0 %v2383, 32
  %v2386 = vpop.permute.xlu0 %2385
  %v2388 = vmul.f32 %v2367, %v2386
  %2390 = vrot.lane.b32.xlu0 %v2317, 80
  %v2391 = vpop.permute.xlu0 %2390
  %2393 = vst.msk [vmem:[#allocation2 + $0x8] sm:$0x30] %vm1797, %v2391
  %2395 = vrot.lane.b32.xlu0 %v2388, 32
  %v2396 = vpop.permute.xlu0 %2395
  %2398 = vst.msk [vmem:[#allocation2] sm:$0xc] %vm1803, %v2396
  %v2399 = vrot.slane %v2317, 4
  %2400 = vrot.lane.b32.xlu0 %v2399, 80
  %v2401 = vpop.permute.xlu0 %2400
  %v2402 = vsel %vm1363, %v2401, 0
  %2404 = vmatpush.msra.mxu0 0.0
  %2405 = vmatpush.msra.mxu0 0.0
  %2406 = vmatpush.msra.mxu0 0.0
  %2407 = vmatpush.msra.mxu0 0.0
  %2408 = vmatpush.msra.mxu0 0.0
  %2409 = vmatpush.msra.mxu0 0.0
  %2410 = vmatpush.msra.mxu0 0.0
  %2411 = vmatpush.msra.mxu0 0.0
  %2412 = vmatpush.msra.mxu0 0.0
  %2413 = vmatpush.msra.mxu0 0.0
  %2414 = vmatpush.msra.mxu0 0.0
  %2415 = vmatpush.msra.mxu0 0.0
  %2416 = vmatpush.msra.mxu0 0.0
  %2417 = vmatpush.msra.mxu0 0.0
  %2418 = vmatpush.msra.mxu0 %v1360
  %2419 = vmatpush.msra.mxu0 %v1359
  %2420 = vmatmul.f32.gmra.mxu0 %v2402
  %v2421 = vpop.f32.mrf.mxu0
  %v2422 = vadd.f32 0.0, %v2421
  %2423 = vdwg.mxu0
  %v2425 = vrot.slane %v2422, 2
  %v2427 = vadd.f32 %v1357, %v2425
  %v2428 = vxor.u32 %v2427, 2147483648
  %v2429 = vmul.f32 %v2428, 1.442695
  %v2430 = vpow.pop %v2429
  %v2431 = vadd.f32 %v2430, 1.0
  %v2432 = vrcp.pop %v2431
  %v2433 = vmul.f32 %v2431, %v2432
  %v2434 = vsub.f32 1.0, %v2433
  %v2435 = vmul.f32 %v2432, %v2434
  %v2436 = vadd.f32 %v2432, %v2435
  %vm2437 = vweird.f32 %v2431
  %vm2438 = vweird.f32 %v2432
  %vm2439 = vmor %vm2437, %vm2438
  %v2440 = vsel %vm2439, %v2432, %v2436
  %v2441 = vand.u32 2147483647, %v2431
  %vm2442 = vcmp.eq.f32.partialorder %v2441, 8.507059e+37
  %v2443 = vand.u32 %v2431, 2147483648
  %v2444 = vor.u32 1.1754944e-38, %v2443
  %v2445 = vsel %vm2442, %v2444, %v2440
  %v2446 = vmul.f32 1.0, %v2445
  %v2447 = vtanh.pop %v2427
  %v2449 = vrot.slane %v2311, 6
  %v2451 = vmul.f32 %v2446, %v2449
  %2453 = vrot.lane.b32.xlu0 %v2447, 96
  %v2454 = vpop.permute.xlu0 %2453
  %v2456 = vmul.f32 %v2446, %v2454
  %2458 = vrot.lane.b32.xlu0 %v2456, 16
  %v2459 = vpop.permute.xlu0 %2458
  %v2461 = vadd.f32 %v2451, %v2459
  %v2462 = vtanh.pop %v2461
  %2464 = vrot.lane.b32.xlu0 %v2462, 32
  %v2465 = vpop.permute.xlu0 %2464
  %v2467 = vmul.f32 %v2446, %v2465
  %v2468 = vrot.slane %v2388, 2
  %2469 = vrot.lane.b32.xlu0 %v2468, 16
  %v2470 = vpop.permute.xlu0 %2469
  %v2471 = vsel %vm1363, %v2470, 0
  %2473 = vmatpush.msra.mxu0 0.0
  %2474 = vmatpush.msra.mxu0 0.0
  %2475 = vmatpush.msra.mxu0 0.0
  %2476 = vmatpush.msra.mxu0 0.0
  %2477 = vmatpush.msra.mxu0 0.0
  %2478 = vmatpush.msra.mxu0 0.0
  %2479 = vmatpush.msra.mxu0 0.0
  %2480 = vmatpush.msra.mxu0 0.0
  %2481 = vmatpush.msra.mxu0 0.0
  %2482 = vmatpush.msra.mxu0 0.0
  %2483 = vmatpush.msra.mxu0 0.0
  %2484 = vmatpush.msra.mxu0 0.0
  %2485 = vmatpush.msra.mxu0 0.0
  %2486 = vmatpush.msra.mxu0 0.0
  %2487 = vmatpush.msra.mxu0 %v1362
  %2488 = vmatpush.msra.mxu0 %v1361
  %2489 = vmatmul.f32.gmra.mxu0 %v2471
  %v2490 = vpop.f32.mrf.mxu0
  %v2491 = vadd.f32 0.0, %v2490
  %2492 = vdwg.mxu0
  %2494 = vrot.lane.b32.xlu0 %v2491, 64
  %v2495 = vpop.permute.xlu0 %2494
  %v2497 = vadd.f32 %v1354, %v2495
  %v2498 = vxor.u32 %v2497, 2147483648
  %v2499 = vmul.f32 %v2498, 1.442695
  %v2500 = vpow.pop %v2499
  %v2501 = vadd.f32 %v2500, 1.0
  %v2502 = vrcp.pop %v2501
  %v2503 = vmul.f32 %v2501, %v2502
  %v2504 = vsub.f32 1.0, %v2503
  %v2505 = vmul.f32 %v2502, %v2504
  %v2506 = vadd.f32 %v2502, %v2505
  %vm2507 = vweird.f32 %v2501
  %vm2508 = vweird.f32 %v2502
  %vm2509 = vmor %vm2507, %vm2508
  %v2510 = vsel %vm2509, %v2502, %v2506
  %v2511 = vand.u32 2147483647, %v2501
  %vm2512 = vcmp.eq.f32.partialorder %v2511, 8.507059e+37
  %v2513 = vand.u32 %v2501, 2147483648
  %v2514 = vor.u32 1.1754944e-38, %v2513
  %v2515 = vsel %vm2512, %v2514, %v2510
  %v2516 = vmul.f32 1.0, %v2515
  %v2517 = vtanh.pop %v2497
  %v2519 = vrot.slane %v2382, 2
  %v2521 = vmul.f32 %v2516, %v2519
  %2523 = vrot.lane.b32.xlu0 %v2517, 96
  %v2524 = vpop.permute.xlu0 %2523
  %v2526 = vmul.f32 %v2516, %v2524
  %2528 = vrot.lane.b32.xlu0 %v2526, 16
  %v2529 = vpop.permute.xlu0 %2528
  %v2531 = vadd.f32 %v2521, %v2529
  %v2532 = vtanh.pop %v2531
  %2534 = vrot.lane.b32.xlu0 %v2532, 32
  %v2535 = vpop.permute.xlu0 %2534
  %v2537 = vmul.f32 %v2516, %v2535
  %2539 = vrot.lane.b32.xlu0 %v2467, 80
  %v2540 = vpop.permute.xlu0 %2539
  %2542 = vst.msk [vmem:[#allocation2 + $0x8] sm:$0xc0] %vm1948, %v2540
  %2544 = vrot.lane.b32.xlu0 %v2537, 32
  %v2545 = vpop.permute.xlu0 %2544
  %2547 = vst.msk [vmem:[#allocation2] sm:$0x3] %vm1954, %v2545
  %v2548 = vld [vmem:[#allocation2] sm:$0xff]
  %v2549 = vld [vmem:[#allocation2 + $0x8] sm:$0xff]
  %v2550 = vld [vmem:[%s8] sm:$0xff]
  %v2551 = vld [vmem:[%s8 + $0x8] sm:$0xff]
  %v2552 = vld [vmem:[%s8 + $0x10] sm:$0xff]
  %v2553 = vld [vmem:[%s8 + $0x18] sm:$0xff]
  %v2554 = vld [vmem:[%s9] sm:$0x1]
  %v2556 = vperm.slane %v2554, 0
  %vm2558 = vcmask 261120
  %v2560 = vsel %vm2558, %v2548, 0
  %v2563 = vsel %vm2558, %v2549, 0
  %2565 = vmatpush.msra.mxu0 0.0
  %2566 = vmatpush.msra.mxu0 0.0
  %2567 = vmatpush.msra.mxu0 0.0
  %2568 = vmatpush.msra.mxu0 0.0
  %2569 = vmatpush.msra.mxu0 0.0
  %2570 = vmatpush.msra.mxu0 0.0
  %2571 = vmatpush.msra.mxu0 0.0
  %2572 = vmatpush.msra.mxu0 0.0
  %2573 = vmatpush.msra.mxu0 0.0
  %2574 = vmatpush.msra.mxu0 0.0
  %2575 = vmatpush.msra.mxu0 0.0
  %2576 = vmatpush.msra.mxu0 0.0
  %2577 = vmatpush.msra.mxu0 %v2553
  %2578 = vmatpush.msra.mxu0 %v2552
  %2579 = vmatpush.msra.mxu0 %v2551
  %2580 = vmatpush.msra.mxu0 %v2550
  %2581 = vmatmul.f32.gmra.mxu0 %v2560
  %v2582 = vpop.f32.mrf.mxu0
  %v2583 = vadd.f32 %v2556, %v2582
  %2584 = vmatmul.f32.gmra.mxu0 %v2563
  %v2585 = vpop.f32.mrf.mxu0
  %v2586 = vadd.f32 %v2556, %v2585
  %2587 = vdwg.mxu0
  %v2588 = vmax.f32 %v2583, 0.0
  %v2589 = vmax.f32 %v2586, 0.0
  %v2590 = vld [vmem:[%s10] sm:$0xff]
  %v2591 = vld [vmem:[%s10 + $0x8] sm:$0xff]
  %v2592 = vld [vmem:[%s10 + $0x10] sm:$0xff]
  %v2593 = vld [vmem:[%s10 + $0x18] sm:$0xff]
  %v2594 = vld [vmem:[%s10 + $0x20] sm:$0xff]
  %v2595 = vld [vmem:[%s10 + $0x28] sm:$0xff]
  %v2596 = vld [vmem:[%s10 + $0x30] sm:$0xff]
  %v2597 = vld [vmem:[%s10 + $0x38] sm:$0xff]
  %v2598 = vld [vmem:[%s10 + $0x40] sm:$0xff]
  %v2599 = vld [vmem:[%s10 + $0x48] sm:$0xff]
  %v2600 = vld [vmem:[%s10 + $0x50] sm:$0xff]
  %v2601 = vld [vmem:[%s10 + $0x58] sm:$0xff]
  %v2602 = vld [vmem:[%s10 + $0x60] sm:$0xff]
  %v2603 = vld [vmem:[%s10 + $0x68] sm:$0xff]
  %v2604 = vld [vmem:[%s10 + $0x70] sm:$0xff]
  %v2605 = vld [vmem:[%s10 + $0x78] sm:$0xff]
  %v2606 = vld [vmem:[%s11] sm:$0x1]
  %v2608 = vperm.slane %v2606, 0
  %2610 = vmatpush.msra.mxu0 %v2605
  %2611 = vmatpush.msra.mxu0 %v2604
  %2612 = vmatpush.msra.mxu0 %v2603
  %2613 = vmatpush.msra.mxu0 %v2602
  %2614 = vmatpush.msra.mxu0 %v2601
  %2615 = vmatpush.msra.mxu0 %v2600
  %2616 = vmatpush.msra.mxu0 %v2599
  %2617 = vmatpush.msra.mxu0 %v2598
  %2618 = vmatpush.msra.mxu0 %v2597
  %2619 = vmatpush.msra.mxu0 %v2596
  %2620 = vmatpush.msra.mxu0 %v2595
  %2621 = vmatpush.msra.mxu0 %v2594
  %2622 = vmatpush.msra.mxu0 %v2593
  %2623 = vmatpush.msra.mxu0 %v2592
  %2624 = vmatpush.msra.mxu0 %v2591
  %2625 = vmatpush.msra.mxu0 %v2590
  %2626 = vmatmul.f32.gmra.mxu0 %v2588
  %v2627 = vpop.f32.mrf.mxu0
  %v2628 = vadd.f32 %v2608, %v2627
  %2629 = vmatmul.f32.gmra.mxu0 %v2589
  %v2630 = vpop.f32.mrf.mxu0
  %v2631 = vadd.f32 %v2608, %v2630
  %2632 = vdwg.mxu0
  %2633 = vst [vmem:[%s12] sm:$0xff] %v2628
  %2634 = vst [vmem:[%s12 + $0x8] sm:$0xff] %v2631
  // Predicated region
  $region50: #{forward.1} parent=0 // pred_check
    _
  $region51: #{forward.1} parent=0 // pred_check_branch
    %2636 = sbr.rel (0) target = $region53
  $region52: #{forward.1} parent=0 // pred_region
    _
  $region53: #{forward.1} parent=0 // pred_fallthru
    _
  // Predicated region
  $region54: #{forward.1} parent=0 // pred_check
    _
  $region55: #{forward.1} parent=0 // pred_check_branch
    %2638 = sbr.rel (0) target = $region57
  $region56: #{forward.1} parent=0 // pred_region
    _
  $region57: #{forward.1} parent=0 // pred_fallthru
    _

</llo_original>
